<compile_context>
chip_gen: v6e
topology: v6e:2x2x1
jax: 0.10.0
libtpu: 0.0.40
codegen_flags: <defaults>
</compile_context>

<pallas_src>
import functools

import numpy as np
import jax
import jax.numpy as jnp
from jax.experimental import pallas as pl
from jax.experimental.pallas import tpu as pltpu


# ----------------------------------------------------------------------------
# Model configuration (small shapes)
# ----------------------------------------------------------------------------
BATCH = 2
CHANNELS, IMG = 4, 16                  # per-modality tensor [B, 4, 16, 16]
ENC_IN = CHANNELS * IMG * IMG          # 1024
MBLE_IN = 10
PROJ_DIM = 32                          # proj_dim
FEAT_DIM = 32                          # multimodal_feature_dim == shared_dim
NUM_EXPERTS = 6
MOE_HIDDEN = 32
MHT_HIDDEN = 32
NUM_HEADS = 3
HEAD_OUT = 2
OUT_PAD = 128                          # lane-padded output slab
MODALITIES = ("modal_a", "modal_b")

# ----------------------------------------------------------------------------
# Static packing layout for the two weight slabs (all offsets 8-row aligned)
# ----------------------------------------------------------------------------
# main slab: [SLAB_ROWS, 128]
ROW_ENC = 0                            # 1024 rows: enc_a_w cols 0:32, enc_b_w cols 32:64
ROW_MBLE = 1024                        # 16 rows : mble_w (10 used) cols 0:32
ROW_PROJ = 1040                        # 32 rows : proj_w cols 0:32
ROW_GATE = 1072                        # 32 rows : moe gate W cols 0:6
ROW_HDR = 1104                         # 32 rows : fused MHT header W cols 0:64
ROW_W2 = 1136                          # 192 rows: MoE W2cat cols 0:32
ROW_BB = 1328                          # 64 rows : MHT backbone W cols 0:32
ROW_HEADS = 1392                       # 32 rows : fused/padded heads W cols 0:128
ROW_VEC = 1424                         # 16 rows : bias / LayerNorm vector block
SLAB_ROWS = 1440
SLAB_COLS = 128

# vector rows inside the ROW_VEC block
(V_ENC_A_B, V_ENC_B_B, V_MBLE_B, V_PROJ_B, V_LN_G, V_LN_B,
 V_MOE_BG, V_BB_B, V_HDR_B, V_HEADS_B) = range(10)
V_MOE_B2 = 10                          # rows 10..15: per-expert output bias [6, 32]

# MoE slab: [WSLAB_ROWS, 192]
WSLAB_COLS = NUM_EXPERTS * MOE_HIDDEN  # 192
WROW_W1 = 0                            # 32 rows : MoE W1cat [32, 192]
WROW_B1 = 32                           # 1 row   : MoE b1cat [1, 192]
WROW_GSEL = 40                         # 6 rows  : gate -> chunk expansion [6, 192]
WSLAB_ROWS = 48


# ----------------------------------------------------------------------------
# Fused Pallas kernel: encoders -> fusion -> proj -> LayerNorm -> MoE -> MHT
# ----------------------------------------------------------------------------
def _fused_forward_kernel(xa_ref, xb_ref, xm_ref, slab_ref, wslab_ref, o_ref,
                          *, batch, eps):
    f32 = jnp.float32

    def dot(a, b):
        return jnp.dot(a, b, preferred_element_type=f32)

    def gelu(v):
        # TODO(synk): PyTorch nn.GELU() default is the exact erf form; the tanh
        # approximation is used for guaranteed Mosaic lowering.
        return jax.nn.gelu(v, approximate=True)

    def vec(row, width):
        r = ROW_VEC + row
        return slab_ref[r:r + 1, 0:width]

    # ---- MultimodalModel encoders (sleep rows 0..B-1, lifelog rows B..2B-1) ----
    wa = slab_ref[ROW_ENC:ROW_ENC + ENC_IN, 0:PROJ_DIM]
    wb = slab_ref[ROW_ENC:ROW_ENC + ENC_IN, PROJ_DIM:2 * PROJ_DIM]
    wm = slab_ref[ROW_MBLE:ROW_MBLE + MBLE_IN, 0:PROJ_DIM]
    fa = gelu(dot(xa_ref[...], wa) + vec(V_ENC_A_B, PROJ_DIM))
    fb = gelu(dot(xb_ref[...], wb) + vec(V_ENC_B_B, PROJ_DIM))
    fm = gelu(dot(xm_ref[...], wm) + vec(V_MBLE_B, PROJ_DIM))
    fused = fa + fb + fm                                        # 'projection' fusion
    wp = slab_ref[ROW_PROJ:ROW_PROJ + PROJ_DIM, 0:FEAT_DIM]
    feat = gelu(dot(fused, wp) + vec(V_PROJ_B, FEAT_DIM))       # [2B, FEAT]

    # ---- norm_before_moe: LayerNorm (+ Dropout == identity in eval) ----
    mean = jnp.mean(feat, axis=-1, keepdims=True)
    var = jnp.mean((feat - mean) ** 2, axis=-1, keepdims=True)
    y = ((feat - mean) * jax.lax.rsqrt(var + eps) * vec(V_LN_G, FEAT_DIM)
         + vec(V_LN_B, FEAT_DIM))

    # ---- MoE (soft gating): experts collapsed into two wide matmuls ----
    wg = slab_ref[ROW_GATE:ROW_GATE + FEAT_DIM, 0:NUM_EXPERTS]
    logits = dot(y, wg) + vec(V_MOE_BG, NUM_EXPERTS)            # [2B, E]
    gate = jax.nn.softmax(logits, axis=-1)                      # [2B, E]
    w1 = wslab_ref[WROW_W1:WROW_W1 + FEAT_DIM, :]               # [D, E*H]
    b1 = wslab_ref[WROW_B1:WROW_B1 + 1, :]                      # [1, E*H]
    gsel = wslab_ref[WROW_GSEL:WROW_GSEL + NUM_EXPERTS, :]      # [E, E*H]
    h = gelu(dot(y, w1) + b1)                                   # [2B, E*H]
    gate_x = dot(gate, gsel)                                    # [2B, E*H]
    w2 = slab_ref[ROW_W2:ROW_W2 + NUM_EXPERTS * MOE_HIDDEN, 0:FEAT_DIM]
    b2 = slab_ref[ROW_VEC + V_MOE_B2:ROW_VEC + V_MOE_B2 + NUM_EXPERTS, 0:FEAT_DIM]
    moe_out = dot(h * gate_x, w2) + dot(gate, b2)               # [2B, FEAT]

    # ---- MultiHeadTask: fused header matmul over all 2B rows ----
    whdr = slab_ref[ROW_HDR:ROW_HDR + FEAT_DIM, 0:2 * MHT_HIDDEN]
    hdr = gelu(dot(moe_out, whdr) + vec(V_HDR_B, 2 * MHT_HIDDEN))   # [2B, 2H]
    proc0 = hdr[:batch, :MHT_HIDDEN]              # sleep rows  -> header 0
    proc1 = hdr[batch:, MHT_HIDDEN:]              # lifelog rows -> header 1
    # backbone on concat(proc0, proc1) == proc0 @ W[:H] + proc1 @ W[H:]
    wbba = slab_ref[ROW_BB:ROW_BB + MHT_HIDDEN, 0:MHT_HIDDEN]
    wbbb = slab_ref[ROW_BB + MHT_HIDDEN:ROW_BB + 2 * MHT_HIDDEN, 0:MHT_HIDDEN]
    bbone = gelu(dot(proc0, wbba) + dot(proc1, wbbb) + vec(V_BB_B, MHT_HIDDEN))
    # all heads fused into one lane-padded weight -> single dense [B, 128] store
    whead = slab_ref[ROW_HEADS:ROW_HEADS + MHT_HIDDEN, 0:OUT_PAD]
    o_ref[...] = dot(bbone, whead) + vec(V_HEADS_B, OUT_PAD)


def fused_forward(slab, wslab, xa, xb, xm):
    rows = xa.shape[0]
    batch = rows // 2
    kernel = functools.partial(_fused_forward_kernel, batch=batch, eps=1e-5)
    vmem = lambda: pl.BlockSpec(memory_space=pltpu.MemorySpace.VMEM)
    out_padded = pl.pallas_call(
        kernel,
        out_shape=jax.ShapeDtypeStruct((batch, OUT_PAD), jnp.float32),
        in_specs=[vmem(), vmem(), vmem(), vmem(), vmem()],
        out_specs=vmem(),
    )(xa, xb, xm, slab, wslab)
    return out_padded[:, :NUM_HEADS * HEAD_OUT]


# ----------------------------------------------------------------------------
# Deterministic parameter init (xavier_uniform Linear weights / zero biases /
# ones-zeros LayerNorm, mirroring init_except_autoencoder), packed on the host
# into the two lane-dense slabs consumed by the kernel.
# ----------------------------------------------------------------------------
def _xavier_uniform(key, fan_in, fan_out):
    bound = (6.0 / (fan_in + fan_out)) ** 0.5
    return np.asarray(
        jax.random.uniform(key, (fan_in, fan_out), jnp.float32, -bound, bound))


def init_params(seed=42):
    key = jax.random.PRNGKey(seed)
    ks = iter(jax.random.split(key, 32))

    enc_a_w = _xavier_uniform(next(ks), ENC_IN, PROJ_DIM)
    enc_b_w = _xavier_uniform(next(ks), ENC_IN, PROJ_DIM)
    mble_w = _xavier_uniform(next(ks), MBLE_IN, PROJ_DIM)
    proj_w = _xavier_uniform(next(ks), PROJ_DIM, FEAT_DIM)
    moe_wg = _xavier_uniform(next(ks), FEAT_DIM, NUM_EXPERTS)
    moe_w1 = np.concatenate([_xavier_uniform(next(ks), FEAT_DIM, MOE_HIDDEN)
                             for _ in range(NUM_EXPERTS)], axis=1)
    moe_w2 = np.concatenate([_xavier_uniform(next(ks), MOE_HIDDEN, FEAT_DIM)
                             for _ in range(NUM_EXPERTS)], axis=0)
    hdr_w = np.concatenate([_xavier_uniform(next(ks), FEAT_DIM, MHT_HIDDEN),
                            _xavier_uniform(next(ks), FEAT_DIM, MHT_HIDDEN)], axis=1)
    bb_w = _xavier_uniform(next(ks), 2 * MHT_HIDDEN, MHT_HIDDEN)
    heads_w = np.concatenate([_xavier_uniform(next(ks), MHT_HIDDEN, HEAD_OUT)
                              for _ in range(NUM_HEADS)], axis=1)

    # ---- main slab [1440, 128] ----
    slab = np.zeros((SLAB_ROWS, SLAB_COLS), np.float32)
    slab[ROW_ENC:ROW_ENC + ENC_IN, 0:PROJ_DIM] = enc_a_w
    slab[ROW_ENC:ROW_ENC + ENC_IN, PROJ_DIM:2 * PROJ_DIM] = enc_b_w
    slab[ROW_MBLE:ROW_MBLE + MBLE_IN, 0:PROJ_DIM] = mble_w
    slab[ROW_PROJ:ROW_PROJ + PROJ_DIM, 0:FEAT_DIM] = proj_w
    slab[ROW_GATE:ROW_GATE + FEAT_DIM, 0:NUM_EXPERTS] = moe_wg
    slab[ROW_HDR:ROW_HDR + FEAT_DIM, 0:2 * MHT_HIDDEN] = hdr_w
    slab[ROW_W2:ROW_W2 + NUM_EXPERTS * MOE_HIDDEN, 0:FEAT_DIM] = moe_w2
    slab[ROW_BB:ROW_BB + 2 * MHT_HIDDEN, 0:MHT_HIDDEN] = bb_w
    slab[ROW_HEADS:ROW_HEADS + MHT_HIDDEN, 0:NUM_HEADS * HEAD_OUT] = heads_w
    # vector block: all Linear biases are zero-init (already zero in the slab);
    # LayerNorm gamma = 1, beta = 0.
    slab[ROW_VEC + V_LN_G, 0:FEAT_DIM] = 1.0

    # ---- MoE slab [48, 192] ----
    wslab = np.zeros((WSLAB_ROWS, WSLAB_COLS), np.float32)
    wslab[WROW_W1:WROW_W1 + FEAT_DIM, :] = moe_w1
    # b1cat is zero-init (row WROW_B1 stays zero)
    gsel = np.repeat(np.eye(NUM_EXPERTS, dtype=np.float32), MOE_HIDDEN, axis=1)
    wslab[WROW_GSEL:WROW_GSEL + NUM_EXPERTS, :] = gsel

    return {"slab": jnp.asarray(slab), "wslab": jnp.asarray(wslab)}


# ----------------------------------------------------------------------------
# Forward pass: all layout plumbing jitted into one XLA program around the
# single pallas_call.
# ----------------------------------------------------------------------------
@jax.jit
def _etri_forward_impl(slab, wslab, xa_s, xa_l, xb_s, xb_l, xm_s, xm_l):
    def flat(t):
        return t.reshape(t.shape[0], -1)                 # NCHW -> [B, C*H*W]

    # Stack sleep (rows 0..B-1) and lifelog (rows B..2B-1): both branches share
    # one kernel launch and one weight DMA.
    xa = jnp.concatenate([flat(xa_s), flat(xa_l)], axis=0)
    xb = jnp.concatenate([flat(xb_s), flat(xb_l)], axis=0)
    xm = jnp.concatenate([xm_s, xm_l], axis=0)
    output = fused_forward(slab, wslab, xa, xb, xm)
    # soft gating + lambda_bal == 0.0 (eval mode) => balance loss is 0
    bal_loss = jnp.zeros((), jnp.float32)
    return output, bal_loss


def etri_forward(params, inputs):
    modal_list = inputs["modality_names"]
    ma, mb = modal_list[0], modal_list[1]
    return _etri_forward_impl(
        params["slab"], params["wslab"],
        inputs["tensor_sleep"][ma], inputs["tensor_lifelog"][ma],
        inputs["tensor_sleep"][mb], inputs["tensor_lifelog"][mb],
        inputs["mble_data_sleep"], inputs["mble_data_lifelog"])


# ----------------------------------------------------------------------------
# Driver
# ----------------------------------------------------------------------------
if __name__ == "__main__":
    params = init_params(seed=42)

    key = jax.random.PRNGKey(0)
    k = jax.random.split(key, 8)
    inputs = {
        "tensor_sleep": {
            "modal_a": jax.random.normal(k[0], (BATCH, CHANNELS, IMG, IMG), jnp.float32),
            "modal_b": jax.random.normal(k[1], (BATCH, CHANNELS, IMG, IMG), jnp.float32),
        },
        "tensor_lifelog": {
            "modal_a": jax.random.normal(k[2], (BATCH, CHANNELS, IMG, IMG), jnp.float32),
            "modal_b": jax.random.normal(k[3], (BATCH, CHANNELS, IMG, IMG), jnp.float32),
        },
        "mble_data_sleep": jax.random.normal(k[4], (BATCH, MBLE_IN), jnp.float32),
        "mble_data_lifelog": jax.random.normal(k[5], (BATCH, MBLE_IN), jnp.float32),
        "modality_names": MODALITIES,
    }

    output, bal_loss = etri_forward(params, inputs)
    jax.block_until_ready(output)
    jax.block_until_ready(bal_loss)
    assert output.shape == (BATCH, NUM_HEADS * HEAD_OUT)
    assert bool(jnp.all(jnp.isfinite(output)))
    print("KERNEL_OK")
</pallas_src>

<mosaic_0001>
module attributes {stable_mosaic.version = 11 : i64} {
  func.func @_fused_forward_kernel(%arg0: memref<4x1024xf32, #tpu.memory_space<vmem>>, %arg1: memref<4x1024xf32, #tpu.memory_space<vmem>>, %arg2: memref<4x10xf32, #tpu.memory_space<vmem>>, %arg3: memref<1440x128xf32, #tpu.memory_space<vmem>>, %arg4: memref<48x192xf32, #tpu.memory_space<vmem>>, %arg5: memref<2x128xf32, #tpu.memory_space<vmem>>) attributes {dimension_semantics = [], scalar_prefetch = 0 : i64, scratch_operands = 0 : i64, tpu.core_type = #tpu.core_type<tc>} {
    %c0 = arith.constant 0 : index
    %c0_0 = arith.constant 0 : index
    %0 = vector.load %arg3[%c0, %c0_0] : memref<1440x128xf32, #tpu.memory_space<vmem>>, vector<1024x32xf32>
    %c0_1 = arith.constant 0 : index
    %c32 = arith.constant 32 : index
    %1 = vector.load %arg3[%c0_1, %c32] : memref<1440x128xf32, #tpu.memory_space<vmem>>, vector<1024x32xf32>
    %c1024 = arith.constant 1024 : index
    %c0_2 = arith.constant 0 : index
    %2 = vector.load %arg3[%c1024, %c0_2] : memref<1440x128xf32, #tpu.memory_space<vmem>>, vector<10x32xf32>
    %c0_3 = arith.constant 0 : index
    %c0_4 = arith.constant 0 : index
    %3 = vector.load %arg0[%c0_3, %c0_4] : memref<4x1024xf32, #tpu.memory_space<vmem>>, vector<4x1024xf32>
    %cst = arith.constant dense<0.000000e+00> : vector<4x32xf32>
    %4 = tpu.matmul %3, %0, %cst {dimension_numbers = #tpu.dot_dimension_numbers<[1], [0], [0], [1], [0, 0, 1, 1], [], []>} : vector<4x1024xf32>, vector<1024x32xf32>, vector<4x32xf32> -> vector<4x32xf32>
    %c1424 = arith.constant 1424 : index
    %c0_5 = arith.constant 0 : index
    %5 = vector.load %arg3[%c1424, %c0_5] : memref<1440x128xf32, #tpu.memory_space<vmem>>, vector<1x32xf32>
    %6 = vector.broadcast %5 : vector<1x32xf32> to vector<4x32xf32>
    %7 = arith.addf %4, %6 : vector<4x32xf32>
    %8 = arith.mulf %7, %7 : vector<4x32xf32>
    %9 = arith.mulf %7, %8 : vector<4x32xf32>
    %cst_6 = arith.constant 4.471500e-02 : f32
    %10 = vector.broadcast %cst_6 : f32 to vector<4x32xf32>
    %11 = arith.mulf %10, %9 : vector<4x32xf32>
    %12 = arith.addf %7, %11 : vector<4x32xf32>
    %cst_7 = arith.constant 0.797884583 : f32
    %13 = vector.broadcast %cst_7 : f32 to vector<4x32xf32>
    %14 = arith.mulf %13, %12 : vector<4x32xf32>
    %15 = math.tanh %14 : vector<4x32xf32>
    %cst_8 = arith.constant 1.000000e+00 : f32
    %16 = vector.broadcast %cst_8 : f32 to vector<4x32xf32>
    %17 = arith.addf %16, %15 : vector<4x32xf32>
    %cst_9 = arith.constant 5.000000e-01 : f32
    %18 = vector.broadcast %cst_9 : f32 to vector<4x32xf32>
    %19 = arith.mulf %18, %17 : vector<4x32xf32>
    %20 = arith.mulf %7, %19 : vector<4x32xf32>
    %c0_10 = arith.constant 0 : index
    %c0_11 = arith.constant 0 : index
    %21 = vector.load %arg1[%c0_10, %c0_11] : memref<4x1024xf32, #tpu.memory_space<vmem>>, vector<4x1024xf32>
    %cst_12 = arith.constant dense<0.000000e+00> : vector<4x32xf32>
    %22 = tpu.matmul %21, %1, %cst_12 {dimension_numbers = #tpu.dot_dimension_numbers<[1], [0], [0], [1], [0, 0, 1, 1], [], []>} : vector<4x1024xf32>, vector<1024x32xf32>, vector<4x32xf32> -> vector<4x32xf32>
    %c1425 = arith.constant 1425 : index
    %c0_13 = arith.constant 0 : index
    %23 = vector.load %arg3[%c1425, %c0_13] : memref<1440x128xf32, #tpu.memory_space<vmem>>, vector<1x32xf32>
    %24 = vector.broadcast %23 : vector<1x32xf32> to vector<4x32xf32>
    %25 = arith.addf %22, %24 : vector<4x32xf32>
    %26 = arith.mulf %25, %25 : vector<4x32xf32>
    %27 = arith.mulf %25, %26 : vector<4x32xf32>
    %cst_14 = arith.constant 4.471500e-02 : f32
    %28 = vector.broadcast %cst_14 : f32 to vector<4x32xf32>
    %29 = arith.mulf %28, %27 : vector<4x32xf32>
    %30 = arith.addf %25, %29 : vector<4x32xf32>
    %cst_15 = arith.constant 0.797884583 : f32
    %31 = vector.broadcast %cst_15 : f32 to vector<4x32xf32>
    %32 = arith.mulf %31, %30 : vector<4x32xf32>
    %33 = math.tanh %32 : vector<4x32xf32>
    %cst_16 = arith.constant 1.000000e+00 : f32
    %34 = vector.broadcast %cst_16 : f32 to vector<4x32xf32>
    %35 = arith.addf %34, %33 : vector<4x32xf32>
    %cst_17 = arith.constant 5.000000e-01 : f32
    %36 = vector.broadcast %cst_17 : f32 to vector<4x32xf32>
    %37 = arith.mulf %36, %35 : vector<4x32xf32>
    %38 = arith.mulf %25, %37 : vector<4x32xf32>
    %c0_18 = arith.constant 0 : index
    %c0_19 = arith.constant 0 : index
    %39 = vector.load %arg2[%c0_18, %c0_19] : memref<4x10xf32, #tpu.memory_space<vmem>>, vector<4x10xf32>
    %cst_20 = arith.constant dense<0.000000e+00> : vector<4x32xf32>
    %40 = tpu.matmul %39, %2, %cst_20 {dimension_numbers = #tpu.dot_dimension_numbers<[1], [0], [0], [1], [0, 0, 1, 1], [], []>} : vector<4x10xf32>, vector<10x32xf32>, vector<4x32xf32> -> vector<4x32xf32>
    %c1426 = arith.constant 1426 : index
    %c0_21 = arith.constant 0 : index
    %41 = vector.load %arg3[%c1426, %c0_21] : memref<1440x128xf32, #tpu.memory_space<vmem>>, vector<1x32xf32>
    %42 = vector.broadcast %41 : vector<1x32xf32> to vector<4x32xf32>
    %43 = arith.addf %40, %42 : vector<4x32xf32>
    %44 = arith.mulf %43, %43 : vector<4x32xf32>
    %45 = arith.mulf %43, %44 : vector<4x32xf32>
    %cst_22 = arith.constant 4.471500e-02 : f32
    %46 = vector.broadcast %cst_22 : f32 to vector<4x32xf32>
    %47 = arith.mulf %46, %45 : vector<4x32xf32>
    %48 = arith.addf %43, %47 : vector<4x32xf32>
    %cst_23 = arith.constant 0.797884583 : f32
    %49 = vector.broadcast %cst_23 : f32 to vector<4x32xf32>
    %50 = arith.mulf %49, %48 : vector<4x32xf32>
    %51 = math.tanh %50 : vector<4x32xf32>
    %cst_24 = arith.constant 1.000000e+00 : f32
    %52 = vector.broadcast %cst_24 : f32 to vector<4x32xf32>
    %53 = arith.addf %52, %51 : vector<4x32xf32>
    %cst_25 = arith.constant 5.000000e-01 : f32
    %54 = vector.broadcast %cst_25 : f32 to vector<4x32xf32>
    %55 = arith.mulf %54, %53 : vector<4x32xf32>
    %56 = arith.mulf %43, %55 : vector<4x32xf32>
    %57 = arith.addf %20, %38 : vector<4x32xf32>
    %58 = arith.addf %57, %56 : vector<4x32xf32>
    %c1040 = arith.constant 1040 : index
    %c0_26 = arith.constant 0 : index
    %59 = vector.load %arg3[%c1040, %c0_26] : memref<1440x128xf32, #tpu.memory_space<vmem>>, vector<32x32xf32>
    %cst_27 = arith.constant dense<0.000000e+00> : vector<4x32xf32>
    %60 = tpu.matmul %58, %59, %cst_27 {dimension_numbers = #tpu.dot_dimension_numbers<[1], [0], [0], [1], [0, 0, 1, 1], [], []>} : vector<4x32xf32>, vector<32x32xf32>, vector<4x32xf32> -> vector<4x32xf32>
    %c1427 = arith.constant 1427 : index
    %c0_28 = arith.constant 0 : index
    %61 = vector.load %arg3[%c1427, %c0_28] : memref<1440x128xf32, #tpu.memory_space<vmem>>, vector<1x32xf32>
    %62 = vector.broadcast %61 : vector<1x32xf32> to vector<4x32xf32>
    %63 = arith.addf %60, %62 : vector<4x32xf32>
    %64 = arith.mulf %63, %63 : vector<4x32xf32>
    %65 = arith.mulf %63, %64 : vector<4x32xf32>
    %cst_29 = arith.constant 4.471500e-02 : f32
    %66 = vector.broadcast %cst_29 : f32 to vector<4x32xf32>
    %67 = arith.mulf %66, %65 : vector<4x32xf32>
    %68 = arith.addf %63, %67 : vector<4x32xf32>
    %cst_30 = arith.constant 0.797884583 : f32
    %69 = vector.broadcast %cst_30 : f32 to vector<4x32xf32>
    %70 = arith.mulf %69, %68 : vector<4x32xf32>
    %71 = math.tanh %70 : vector<4x32xf32>
    %cst_31 = arith.constant 1.000000e+00 : f32
    %72 = vector.broadcast %cst_31 : f32 to vector<4x32xf32>
    %73 = arith.addf %72, %71 : vector<4x32xf32>
    %cst_32 = arith.constant 5.000000e-01 : f32
    %74 = vector.broadcast %cst_32 : f32 to vector<4x32xf32>
    %75 = arith.mulf %74, %73 : vector<4x32xf32>
    %76 = arith.mulf %63, %75 : vector<4x32xf32>
    %cst_33 = arith.constant dense<0.000000e+00> : vector<4xf32>
    %77 = vector.multi_reduction <add>, %76, %cst_33 [1] : vector<4x32xf32> to vector<4xf32>
    %78 = vector.shape_cast %77 : vector<4xf32> to vector<4x1xf32>
    %cst_34 = arith.constant 3.200000e+01 : f32
    %79 = vector.broadcast %cst_34 : f32 to vector<4x1xf32>
    %80 = arith.divf %78, %79 : vector<4x1xf32>
    %81 = vector.broadcast %80 : vector<4x1xf32> to vector<4x32xf32>
    %82 = arith.subf %76, %81 : vector<4x32xf32>
    %83 = arith.mulf %82, %82 : vector<4x32xf32>
    %cst_35 = arith.constant dense<0.000000e+00> : vector<4xf32>
    %84 = vector.multi_reduction <add>, %83, %cst_35 [1] : vector<4x32xf32> to vector<4xf32>
    %85 = vector.shape_cast %84 : vector<4xf32> to vector<4x1xf32>
    %cst_36 = arith.constant 3.200000e+01 : f32
    %86 = vector.broadcast %cst_36 : f32 to vector<4x1xf32>
    %87 = arith.divf %85, %86 : vector<4x1xf32>
    %88 = vector.broadcast %80 : vector<4x1xf32> to vector<4x32xf32>
    %89 = arith.subf %76, %88 : vector<4x32xf32>
    %cst_37 = arith.constant 9.99999974E-6 : f32
    %90 = vector.broadcast %cst_37 : f32 to vector<4x1xf32>
    %91 = arith.addf %87, %90 : vector<4x1xf32>
    %92 = math.rsqrt %91 : vector<4x1xf32>
    %93 = vector.broadcast %92 : vector<4x1xf32> to vector<4x32xf32>
    %94 = arith.mulf %89, %93 : vector<4x32xf32>
    %c1428 = arith.constant 1428 : index
    %c0_38 = arith.constant 0 : index
    %95 = vector.load %arg3[%c1428, %c0_38] : memref<1440x128xf32, #tpu.memory_space<vmem>>, vector<1x32xf32>
    %96 = vector.broadcast %95 : vector<1x32xf32> to vector<4x32xf32>
    %97 = arith.mulf %94, %96 : vector<4x32xf32>
    %c1429 = arith.constant 1429 : index
    %c0_39 = arith.constant 0 : index
    %98 = vector.load %arg3[%c1429, %c0_39] : memref<1440x128xf32, #tpu.memory_space<vmem>>, vector<1x32xf32>
    %99 = vector.broadcast %98 : vector<1x32xf32> to vector<4x32xf32>
    %100 = arith.addf %97, %99 : vector<4x32xf32>
    %c1072 = arith.constant 1072 : index
    %c0_40 = arith.constant 0 : index
    %101 = vector.load %arg3[%c1072, %c0_40] : memref<1440x128xf32, #tpu.memory_space<vmem>>, vector<32x6xf32>
    %cst_41 = arith.constant dense<0.000000e+00> : vector<4x6xf32>
    %102 = tpu.matmul %100, %101, %cst_41 {dimension_numbers = #tpu.dot_dimension_numbers<[1], [0], [0], [1], [0, 0, 1, 1], [], []>} : vector<4x32xf32>, vector<32x6xf32>, vector<4x6xf32> -> vector<4x6xf32>
    %c1430 = arith.constant 1430 : index
    %c0_42 = arith.constant 0 : index
    %103 = vector.load %arg3[%c1430, %c0_42] : memref<1440x128xf32, #tpu.memory_space<vmem>>, vector<1x6xf32>
    %104 = vector.broadcast %103 : vector<1x6xf32> to vector<4x6xf32>
    %105 = arith.addf %102, %104 : vector<4x6xf32>
    %cst_43 = arith.constant dense<0xFF800000> : vector<4xf32>
    %106 = vector.multi_reduction <maximumf>, %105, %cst_43 [1] : vector<4x6xf32> to vector<4xf32>
    %cst_44 = arith.constant 0xFF800000 : f32
    %107 = vector.broadcast %cst_44 : f32 to vector<4xf32>
    %108 = arith.maximumf %107, %106 : vector<4xf32>
    %109 = vector.shape_cast %108 : vector<4xf32> to vector<4x1xf32>
    %110 = vector.broadcast %109 : vector<4x1xf32> to vector<4x6xf32>
    %111 = arith.subf %105, %110 : vector<4x6xf32>
    %112 = math.exp %111 : vector<4x6xf32>
    %cst_45 = arith.constant dense<0.000000e+00> : vector<4xf32>
    %113 = vector.multi_reduction <add>, %112, %cst_45 [1] : vector<4x6xf32> to vector<4xf32>
    %114 = vector.shape_cast %113 : vector<4xf32> to vector<4x1xf32>
    %115 = vector.broadcast %114 : vector<4x1xf32> to vector<4x6xf32>
    %116 = arith.divf %112, %115 : vector<4x6xf32>
    %c0_46 = arith.constant 0 : index
    %c0_47 = arith.constant 0 : index
    %117 = vector.load %arg4[%c0_46, %c0_47] : memref<48x192xf32, #tpu.memory_space<vmem>>, vector<32x192xf32>
    %c32_48 = arith.constant 32 : index
    %c0_49 = arith.constant 0 : index
    %118 = vector.load %arg4[%c32_48, %c0_49] : memref<48x192xf32, #tpu.memory_space<vmem>>, vector<1x192xf32>
    %c40 = arith.constant 40 : index
    %c0_50 = arith.constant 0 : index
    %119 = vector.load %arg4[%c40, %c0_50] : memref<48x192xf32, #tpu.memory_space<vmem>>, vector<6x192xf32>
    %cst_51 = arith.constant dense<0.000000e+00> : vector<4x192xf32>
    %120 = tpu.matmul %100, %117, %cst_51 {dimension_numbers = #tpu.dot_dimension_numbers<[1], [0], [0], [1], [0, 0, 1, 1], [], []>} : vector<4x32xf32>, vector<32x192xf32>, vector<4x192xf32> -> vector<4x192xf32>
    %121 = vector.broadcast %118 : vector<1x192xf32> to vector<4x192xf32>
    %122 = arith.addf %120, %121 : vector<4x192xf32>
    %123 = arith.mulf %122, %122 : vector<4x192xf32>
    %124 = arith.mulf %122, %123 : vector<4x192xf32>
    %cst_52 = arith.constant 4.471500e-02 : f32
    %125 = vector.broadcast %cst_52 : f32 to vector<4x192xf32>
    %126 = arith.mulf %125, %124 : vector<4x192xf32>
    %127 = arith.addf %122, %126 : vector<4x192xf32>
    %cst_53 = arith.constant 0.797884583 : f32
    %128 = vector.broadcast %cst_53 : f32 to vector<4x192xf32>
    %129 = arith.mulf %128, %127 : vector<4x192xf32>
    %130 = math.tanh %129 : vector<4x192xf32>
    %cst_54 = arith.constant 1.000000e+00 : f32
    %131 = vector.broadcast %cst_54 : f32 to vector<4x192xf32>
    %132 = arith.addf %131, %130 : vector<4x192xf32>
    %cst_55 = arith.constant 5.000000e-01 : f32
    %133 = vector.broadcast %cst_55 : f32 to vector<4x192xf32>
    %134 = arith.mulf %133, %132 : vector<4x192xf32>
    %135 = arith.mulf %122, %134 : vector<4x192xf32>
    %cst_56 = arith.constant dense<0.000000e+00> : vector<4x192xf32>
    %136 = tpu.matmul %116, %119, %cst_56 {dimension_numbers = #tpu.dot_dimension_numbers<[1], [0], [0], [1], [0, 0, 1, 1], [], []>} : vector<4x6xf32>, vector<6x192xf32>, vector<4x192xf32> -> vector<4x192xf32>
    %c1136 = arith.constant 1136 : index
    %c0_57 = arith.constant 0 : index
    %137 = vector.load %arg3[%c1136, %c0_57] : memref<1440x128xf32, #tpu.memory_space<vmem>>, vector<192x32xf32>
    %c1434 = arith.constant 1434 : index
    %c0_58 = arith.constant 0 : index
    %138 = vector.load %arg3[%c1434, %c0_58] : memref<1440x128xf32, #tpu.memory_space<vmem>>, vector<6x32xf32>
    %139 = arith.mulf %135, %136 : vector<4x192xf32>
    %cst_59 = arith.constant dense<0.000000e+00> : vector<4x32xf32>
    %140 = tpu.matmul %139, %137, %cst_59 {dimension_numbers = #tpu.dot_dimension_numbers<[1], [0], [0], [1], [0, 0, 1, 1], [], []>} : vector<4x192xf32>, vector<192x32xf32>, vector<4x32xf32> -> vector<4x32xf32>
    %cst_60 = arith.constant dense<0.000000e+00> : vector<4x32xf32>
    %141 = tpu.matmul %116, %138, %cst_60 {dimension_numbers = #tpu.dot_dimension_numbers<[1], [0], [0], [1], [0, 0, 1, 1], [], []>} : vector<4x6xf32>, vector<6x32xf32>, vector<4x32xf32> -> vector<4x32xf32>
    %142 = arith.addf %140, %141 : vector<4x32xf32>
    %c1104 = arith.constant 1104 : index
    %c0_61 = arith.constant 0 : index
    %143 = vector.load %arg3[%c1104, %c0_61] : memref<1440x128xf32, #tpu.memory_space<vmem>>, vector<32x64xf32>
    %cst_62 = arith.constant dense<0.000000e+00> : vector<4x64xf32>
    %144 = tpu.matmul %142, %143, %cst_62 {dimension_numbers = #tpu.dot_dimension_numbers<[1], [0], [0], [1], [0, 0, 1, 1], [], []>} : vector<4x32xf32>, vector<32x64xf32>, vector<4x64xf32> -> vector<4x64xf32>
    %c1432 = arith.constant 1432 : index
    %c0_63 = arith.constant 0 : index
    %145 = vector.load %arg3[%c1432, %c0_63] : memref<1440x128xf32, #tpu.memory_space<vmem>>, vector<1x64xf32>
    %146 = vector.broadcast %145 : vector<1x64xf32> to vector<4x64xf32>
    %147 = arith.addf %144, %146 : vector<4x64xf32>
    %148 = arith.mulf %147, %147 : vector<4x64xf32>
    %149 = arith.mulf %147, %148 : vector<4x64xf32>
    %cst_64 = arith.constant 4.471500e-02 : f32
    %150 = vector.broadcast %cst_64 : f32 to vector<4x64xf32>
    %151 = arith.mulf %150, %149 : vector<4x64xf32>
    %152 = arith.addf %147, %151 : vector<4x64xf32>
    %cst_65 = arith.constant 0.797884583 : f32
    %153 = vector.broadcast %cst_65 : f32 to vector<4x64xf32>
    %154 = arith.mulf %153, %152 : vector<4x64xf32>
    %155 = math.tanh %154 : vector<4x64xf32>
    %cst_66 = arith.constant 1.000000e+00 : f32
    %156 = vector.broadcast %cst_66 : f32 to vector<4x64xf32>
    %157 = arith.addf %156, %155 : vector<4x64xf32>
    %cst_67 = arith.constant 5.000000e-01 : f32
    %158 = vector.broadcast %cst_67 : f32 to vector<4x64xf32>
    %159 = arith.mulf %158, %157 : vector<4x64xf32>
    %160 = arith.mulf %147, %159 : vector<4x64xf32>
    %161 = vector.extract_strided_slice %160 {offsets = [0, 0], sizes = [2, 32], strides = [1, 1]} : vector<4x64xf32> to vector<2x32xf32>
    %162 = vector.extract_strided_slice %160 {offsets = [2, 32], sizes = [2, 32], strides = [1, 1]} : vector<4x64xf32> to vector<2x32xf32>
    %c1328 = arith.constant 1328 : index
    %c0_68 = arith.constant 0 : index
    %163 = vector.load %arg3[%c1328, %c0_68] : memref<1440x128xf32, #tpu.memory_space<vmem>>, vector<32x32xf32>
    %c1360 = arith.constant 1360 : index
    %c0_69 = arith.constant 0 : index
    %164 = vector.load %arg3[%c1360, %c0_69] : memref<1440x128xf32, #tpu.memory_space<vmem>>, vector<32x32xf32>
    %cst_70 = arith.constant dense<0.000000e+00> : vector<2x32xf32>
    %165 = tpu.matmul %161, %163, %cst_70 {dimension_numbers = #tpu.dot_dimension_numbers<[1], [0], [0], [1], [0, 0, 1, 1], [], []>} : vector<2x32xf32>, vector<32x32xf32>, vector<2x32xf32> -> vector<2x32xf32>
    %cst_71 = arith.constant dense<0.000000e+00> : vector<2x32xf32>
    %166 = tpu.matmul %162, %164, %cst_71 {dimension_numbers = #tpu.dot_dimension_numbers<[1], [0], [0], [1], [0, 0, 1, 1], [], []>} : vector<2x32xf32>, vector<32x32xf32>, vector<2x32xf32> -> vector<2x32xf32>
    %167 = arith.addf %165, %166 : vector<2x32xf32>
    %c1431 = arith.constant 1431 : index
    %c0_72 = arith.constant 0 : index
    %168 = vector.load %arg3[%c1431, %c0_72] : memref<1440x128xf32, #tpu.memory_space<vmem>>, vector<1x32xf32>
    %169 = vector.broadcast %168 : vector<1x32xf32> to vector<2x32xf32>
    %170 = arith.addf %167, %169 : vector<2x32xf32>
    %171 = arith.mulf %170, %170 : vector<2x32xf32>
    %172 = arith.mulf %170, %171 : vector<2x32xf32>
    %cst_73 = arith.constant 4.471500e-02 : f32
    %173 = vector.broadcast %cst_73 : f32 to vector<2x32xf32>
    %174 = arith.mulf %173, %172 : vector<2x32xf32>
    %175 = arith.addf %170, %174 : vector<2x32xf32>
    %cst_74 = arith.constant 0.797884583 : f32
    %176 = vector.broadcast %cst_74 : f32 to vector<2x32xf32>
    %177 = arith.mulf %176, %175 : vector<2x32xf32>
    %178 = math.tanh %177 : vector<2x32xf32>
    %cst_75 = arith.constant 1.000000e+00 : f32
    %179 = vector.broadcast %cst_75 : f32 to vector<2x32xf32>
    %180 = arith.addf %179, %178 : vector<2x32xf32>
    %cst_76 = arith.constant 5.000000e-01 : f32
    %181 = vector.broadcast %cst_76 : f32 to vector<2x32xf32>
    %182 = arith.mulf %181, %180 : vector<2x32xf32>
    %183 = arith.mulf %170, %182 : vector<2x32xf32>
    %c1392 = arith.constant 1392 : index
    %c0_77 = arith.constant 0 : index
    %184 = vector.load %arg3[%c1392, %c0_77] : memref<1440x128xf32, #tpu.memory_space<vmem>>, vector<32x128xf32>
    %cst_78 = arith.constant dense<0.000000e+00> : vector<2x128xf32>
    %185 = tpu.matmul %183, %184, %cst_78 {dimension_numbers = #tpu.dot_dimension_numbers<[1], [0], [0], [1], [0, 0, 1, 1], [], []>} : vector<2x32xf32>, vector<32x128xf32>, vector<2x128xf32> -> vector<2x128xf32>
    %c1433 = arith.constant 1433 : index
    %c0_79 = arith.constant 0 : index
    %186 = vector.load %arg3[%c1433, %c0_79] : memref<1440x128xf32, #tpu.memory_space<vmem>>, vector<1x128xf32>
    %187 = vector.broadcast %186 : vector<1x128xf32> to vector<2x128xf32>
    %188 = arith.addf %185, %187 : vector<2x128xf32>
    %c0_80 = arith.constant 0 : index
    %c0_81 = arith.constant 0 : index
    %189 = vector.load %arg5[%c0_80, %c0_81] : memref<2x128xf32, #tpu.memory_space<vmem>>, vector<2x128xf32>
    tpu.vector_store %arg5[%c0_80, %c0_81], %188 {strides = array<i32>} : memref<2x128xf32, #tpu.memory_space<vmem>>, vector<2x128xf32>,
    return
  }
}

</mosaic_0001>

<llo_original>
// kernel: _etri_forward_impl.1
$region0: #{_etri_forward_impl.1}
  #allocation0 [shape = 'u32[]', space=smem, size = 0x4, offset = 0x4, fixed_abs, tag = 'smem constant byte address 0x4 - core index']
  #allocation1 [shape = 'u32[144,128]{1,0:T(1,128)}', space=vmem, size = 0x12000, scoped, tag = 'internal scratch']
  %s0 = inlined_call_operand.vmem [shape: f32[4,1024], index: 0, kind: input, shape index: {}]
  %s1 = inlined_call_operand.vmem [shape: f32[4,1024], index: 1, kind: input, shape index: {}]
  %s2 = inlined_call_operand.vmem [shape: f32[4,10], index: 2, kind: input, shape index: {}]
  %s3 = inlined_call_operand.hbm [shape: f32[1440,128], index: 3, kind: input, shape index: {}]
  %s4 = inlined_call_operand.vmem [shape: f32[48,192], index: 4, kind: input, shape index: {}]
  %s5 = inlined_call_operand.hbm [shape: f32[2,128], index: 5, kind: output, shape index: {}]
  %s6 = sld [smem:[#allocation0]]
  $region34: #{_etri_forward_impl.1} parent=0
    _
  %s8 = ssub.s32 1, %s6
  %s9 = scalar_select 0, %s8, %s6
  $region1: #{_etri_forward_impl.1} parent=0
    #allocation2 [shape = 'u8[737280]{0}', space=vmem, size = 0xb4000, scoped, tag = 'input window, operand 3, single buffered']
    #allocation3 [shape = 's32[1]{0}', space=sflag, size = 0x4, scoped, tag = 'scoped memory for _etri_forward_impl.1']
    #allocation4 [shape = 's32[1]{0}', space=sflag, size = 0x4, scoped, tag = 'scoped memory for _etri_forward_impl.1']
    #allocation5 [shape = 'u8[1024]{0}', space=vmem, size = 0x400, scoped, tag = 'output window, operand 0, single buffered']
    %10 = vsyncpa [#allocation3], 0
    %11 = vsyncpa [#allocation4], 0
    // Predicated region
    $region2: #{_etri_forward_impl.1} parent=1 // pred_check
      _
    $region3: #{_etri_forward_impl.1} parent=1 // pred_check_branch
      %13 = sbr.rel (0) target = $region5
    $region4: #{_etri_forward_impl.1} parent=1 // pred_region
      _
    $region5: #{_etri_forward_impl.1} parent=1 // pred_fallthru
      _
    // Predicated region
    $region6: #{_etri_forward_impl.1} parent=1 // pred_check
      _
    $region7: #{_etri_forward_impl.1} parent=1 // pred_check_branch
      %15 = sbr.rel (0) target = $region9
    $region8: #{_etri_forward_impl.1} parent=1 // pred_region
      _
    $region9: #{_etri_forward_impl.1} parent=1 // pred_fallthru
      _
    // Predicated region
    $region10: #{_etri_forward_impl.1} parent=1 // pred_check
      _
    $region11: #{_etri_forward_impl.1} parent=1 // pred_check_branch
      %17 = sbr.rel (0) target = $region13
    $region12: #{_etri_forward_impl.1} parent=1 // pred_region
      _
    $region13: #{_etri_forward_impl.1} parent=1 // pred_fallthru
      _
    // Predicated region
    $region14: #{_etri_forward_impl.1} parent=1 // pred_check
      _
    $region15: #{_etri_forward_impl.1} parent=1 // pred_check_branch
      %19 = sbr.rel (0) target = $region17
    $region16: #{_etri_forward_impl.1} parent=1 // pred_region
      %s21 = ssub.s32 23040, 23040
      %22 = vsyncadd [#allocation3], %s21
      %s23 = sshll.u32 [#allocation2], 4
      %s24 = int_to_ptr.vmem [resolvable:$true] %s23
      %29 = dma.hbm_to_vmem [thread:$0]  %s3, 23040, %s24, [#allocation3], 128, 128, 8
    $region17: #{_etri_forward_impl.1} parent=1 // pred_fallthru
      _
    // Predicated region
    $region18: #{_etri_forward_impl.1} parent=1 // pred_check
      _
    $region19: #{_etri_forward_impl.1} parent=1 // pred_check_branch
      %31 = sbr.rel (0) target = $region21
    $region20: #{_etri_forward_impl.1} parent=1 // pred_region
      _
    $region21: #{_etri_forward_impl.1} parent=1 // pred_fallthru
      _
    // Predicated region
    $region22: #{_etri_forward_impl.1} parent=1 // pred_check
      _
    $region23: #{_etri_forward_impl.1} parent=1 // pred_check_branch
      %33 = sbr.rel (0) target = $region25
    $region24: #{_etri_forward_impl.1} parent=1 // pred_region
      %34 = dma.done [#allocation3], 23040
    $region25: #{_etri_forward_impl.1} parent=1 // pred_fallthru
      _
    %v35 = vld [vmem:[#allocation2] sm:$0xff]
    %v36 = vld [vmem:[#allocation2 + $0x8] sm:$0xff]
    %v37 = vld [vmem:[#allocation2 + $0x10] sm:$0xff]
    %v38 = vld [vmem:[#allocation2 + $0x18] sm:$0xff]
    %v39 = vld [vmem:[#allocation2 + $0x20] sm:$0xff]
    %v40 = vld [vmem:[#allocation2 + $0x28] sm:$0xff]
    %v41 = vld [vmem:[#allocation2 + $0x30] sm:$0xff]
    %v42 = vld [vmem:[#allocation2 + $0x38] sm:$0xff]
    %v43 = vld [vmem:[#allocation2 + $0x40] sm:$0xff]
    %v44 = vld [vmem:[#allocation2 + $0x48] sm:$0xff]
    %v45 = vld [vmem:[#allocation2 + $0x50] sm:$0xff]
    %v46 = vld [vmem:[#allocation2 + $0x58] sm:$0xff]
    %v47 = vld [vmem:[#allocation2 + $0x60] sm:$0xff]
    %v48 = vld [vmem:[#allocation2 + $0x68] sm:$0xff]
    %v49 = vld [vmem:[#allocation2 + $0x70] sm:$0xff]
    %v50 = vld [vmem:[#allocation2 + $0x78] sm:$0xff]
    %v51 = vld [vmem:[#allocation2 + $0x80] sm:$0xff]
    %v52 = vld [vmem:[#allocation2 + $0x88] sm:$0xff]
    %v53 = vld [vmem:[#allocation2 + $0x90] sm:$0xff]
    %v54 = vld [vmem:[#allocation2 + $0x98] sm:$0xff]
    %v55 = vld [vmem:[#allocation2 + $0xa0] sm:$0xff]
    %v56 = vld [vmem:[#allocation2 + $0xa8] sm:$0xff]
    %v57 = vld [vmem:[#allocation2 + $0xb0] sm:$0xff]
    %v58 = vld [vmem:[#allocation2 + $0xb8] sm:$0xff]
    %v59 = vld [vmem:[#allocation2 + $0xc0] sm:$0xff]
    %v60 = vld [vmem:[#allocation2 + $0xc8] sm:$0xff]
    %v61 = vld [vmem:[#allocation2 + $0xd0] sm:$0xff]
    %v62 = vld [vmem:[#allocation2 + $0xd8] sm:$0xff]
    %v63 = vld [vmem:[#allocation2 + $0xe0] sm:$0xff]
    %v64 = vld [vmem:[#allocation2 + $0xe8] sm:$0xff]
    %v65 = vld [vmem:[#allocation2 + $0xf0] sm:$0xff]
    %v66 = vld [vmem:[#allocation2 + $0xf8] sm:$0xff]
    %v67 = vld [vmem:[#allocation2 + $0x100] sm:$0xff]
    %v68 = vld [vmem:[#allocation2 + $0x108] sm:$0xff]
    %v69 = vld [vmem:[#allocation2 + $0x110] sm:$0xff]
    %v70 = vld [vmem:[#allocation2 + $0x118] sm:$0xff]
    %v71 = vld [vmem:[#allocation2 + $0x120] sm:$0xff]
    %v72 = vld [vmem:[#allocation2 + $0x128] sm:$0xff]
    %v73 = vld [vmem:[#allocation2 + $0x130] sm:$0xff]
    %v74 = vld [vmem:[#allocation2 + $0x138] sm:$0xff]
    %v75 = vld [vmem:[#allocation2 + $0x140] sm:$0xff]
    %v76 = vld [vmem:[#allocation2 + $0x148] sm:$0xff]
    %v77 = vld [vmem:[#allocation2 + $0x150] sm:$0xff]
    %v78 = vld [vmem:[#allocation2 + $0x158] sm:$0xff]
    %v79 = vld [vmem:[#allocation2 + $0x160] sm:$0xff]
    %v80 = vld [vmem:[#allocation2 + $0x168] sm:$0xff]
    %v81 = vld [vmem:[#allocation2 + $0x170] sm:$0xff]
    %v82 = vld [vmem:[#allocation2 + $0x178] sm:$0xff]
    %v83 = vld [vmem:[#allocation2 + $0x180] sm:$0xff]
    %v84 = vld [vmem:[#allocation2 + $0x188] sm:$0xff]
    %v85 = vld [vmem:[#allocation2 + $0x190] sm:$0xff]
    %v86 = vld [vmem:[#allocation2 + $0x198] sm:$0xff]
    %v87 = vld [vmem:[#allocation2 + $0x1a0] sm:$0xff]
    %v88 = vld [vmem:[#allocation2 + $0x1a8] sm:$0xff]
    %v89 = vld [vmem:[#allocation2 + $0x1b0] sm:$0xff]
    %v90 = vld [vmem:[#allocation2 + $0x1b8] sm:$0xff]
    %v91 = vld [vmem:[#allocation2 + $0x1c0] sm:$0xff]
    %v92 = vld [vmem:[#allocation2 + $0x1c8] sm:$0xff]
    %v93 = vld [vmem:[#allocation2 + $0x1d0] sm:$0xff]
    %v94 = vld [vmem:[#allocation2 + $0x1d8] sm:$0xff]
    %v95 = vld [vmem:[#allocation2 + $0x1e0] sm:$0xff]
    %v96 = vld [vmem:[#allocation2 + $0x1e8] sm:$0xff]
    %v97 = vld [vmem:[#allocation2 + $0x1f0] sm:$0xff]
    %v98 = vld [vmem:[#allocation2 + $0x1f8] sm:$0xff]
    %v99 = vld [vmem:[#allocation2 + $0x200] sm:$0xff]
    %v100 = vld [vmem:[#allocation2 + $0x208] sm:$0xff]
    %v101 = vld [vmem:[#allocation2 + $0x210] sm:$0xff]
    %v102 = vld [vmem:[#allocation2 + $0x218] sm:$0xff]
    %v103 = vld [vmem:[#allocation2 + $0x220] sm:$0xff]
    %v104 = vld [vmem:[#allocation2 + $0x228] sm:$0xff]
    %v105 = vld [vmem:[#allocation2 + $0x230] sm:$0xff]
    %v106 = vld [vmem:[#allocation2 + $0x238] sm:$0xff]
    %v107 = vld [vmem:[#allocation2 + $0x240] sm:$0xff]
    %v108 = vld [vmem:[#allocation2 + $0x248] sm:$0xff]
    %v109 = vld [vmem:[#allocation2 + $0x250] sm:$0xff]
    %v110 = vld [vmem:[#allocation2 + $0x258] sm:$0xff]
    %v111 = vld [vmem:[#allocation2 + $0x260] sm:$0xff]
    %v112 = vld [vmem:[#allocation2 + $0x268] sm:$0xff]
    %v113 = vld [vmem:[#allocation2 + $0x270] sm:$0xff]
    %v114 = vld [vmem:[#allocation2 + $0x278] sm:$0xff]
    %v115 = vld [vmem:[#allocation2 + $0x280] sm:$0xff]
    %v116 = vld [vmem:[#allocation2 + $0x288] sm:$0xff]
    %v117 = vld [vmem:[#allocation2 + $0x290] sm:$0xff]
    %v118 = vld [vmem:[#allocation2 + $0x298] sm:$0xff]
    %v119 = vld [vmem:[#allocation2 + $0x2a0] sm:$0xff]
    %v120 = vld [vmem:[#allocation2 + $0x2a8] sm:$0xff]
    %v121 = vld [vmem:[#allocation2 + $0x2b0] sm:$0xff]
    %v122 = vld [vmem:[#allocation2 + $0x2b8] sm:$0xff]
    %v123 = vld [vmem:[#allocation2 + $0x2c0] sm:$0xff]
    %v124 = vld [vmem:[#allocation2 + $0x2c8] sm:$0xff]
    %v125 = vld [vmem:[#allocation2 + $0x2d0] sm:$0xff]
    %v126 = vld [vmem:[#allocation2 + $0x2d8] sm:$0xff]
    %v127 = vld [vmem:[#allocation2 + $0x2e0] sm:$0xff]
    %v128 = vld [vmem:[#allocation2 + $0x2e8] sm:$0xff]
    %v129 = vld [vmem:[#allocation2 + $0x2f0] sm:$0xff]
    %v130 = vld [vmem:[#allocation2 + $0x2f8] sm:$0xff]
    %v131 = vld [vmem:[#allocation2 + $0x300] sm:$0xff]
    %v132 = vld [vmem:[#allocation2 + $0x308] sm:$0xff]
    %v133 = vld [vmem:[#allocation2 + $0x310] sm:$0xff]
    %v134 = vld [vmem:[#allocation2 + $0x318] sm:$0xff]
    %v135 = vld [vmem:[#allocation2 + $0x320] sm:$0xff]
    %v136 = vld [vmem:[#allocation2 + $0x328] sm:$0xff]
    %v137 = vld [vmem:[#allocation2 + $0x330] sm:$0xff]
    %v138 = vld [vmem:[#allocation2 + $0x338] sm:$0xff]
    %v139 = vld [vmem:[#allocation2 + $0x340] sm:$0xff]
    %v140 = vld [vmem:[#allocation2 + $0x348] sm:$0xff]
    %v141 = vld [vmem:[#allocation2 + $0x350] sm:$0xff]
    %v142 = vld [vmem:[#allocation2 + $0x358] sm:$0xff]
    %v143 = vld [vmem:[#allocation2 + $0x360] sm:$0xff]
    %v144 = vld [vmem:[#allocation2 + $0x368] sm:$0xff]
    %v145 = vld [vmem:[#allocation2 + $0x370] sm:$0xff]
    %v146 = vld [vmem:[#allocation2 + $0x378] sm:$0xff]
    %v147 = vld [vmem:[#allocation2 + $0x380] sm:$0xff]
    %v148 = vld [vmem:[#allocation2 + $0x388] sm:$0xff]
    %v149 = vld [vmem:[#allocation2 + $0x390] sm:$0xff]
    %v150 = vld [vmem:[#allocation2 + $0x398] sm:$0xff]
    %v151 = vld [vmem:[#allocation2 + $0x3a0] sm:$0xff]
    %v152 = vld [vmem:[#allocation2 + $0x3a8] sm:$0xff]
    %v153 = vld [vmem:[#allocation2 + $0x3b0] sm:$0xff]
    %v154 = vld [vmem:[#allocation2 + $0x3b8] sm:$0xff]
    %v155 = vld [vmem:[#allocation2 + $0x3c0] sm:$0xff]
    %v156 = vld [vmem:[#allocation2 + $0x3c8] sm:$0xff]
    %v157 = vld [vmem:[#allocation2 + $0x3d0] sm:$0xff]
    %v158 = vld [vmem:[#allocation2 + $0x3d8] sm:$0xff]
    %v159 = vld [vmem:[#allocation2 + $0x3e0] sm:$0xff]
    %v160 = vld [vmem:[#allocation2 + $0x3e8] sm:$0xff]
    %v161 = vld [vmem:[#allocation2 + $0x3f0] sm:$0xff]
    %v162 = vld [vmem:[#allocation2 + $0x3f8] sm:$0xff]
    %v163 = vld [vmem:[#allocation2 + $0x400] sm:$0xff]
    %v164 = vld [vmem:[#allocation2 + $0x408] sm:$0x3]
    %v165 = vld [vmem:[%s0] sm:$0xff]
    %v166 = vld [vmem:[%s0 + $0x8] sm:$0xff]
    %v167 = vld [vmem:[%s0 + $0x10] sm:$0xff]
    %v168 = vld [vmem:[%s0 + $0x18] sm:$0xff]
    %v169 = vld [vmem:[#allocation2 + $0x590] sm:$0x1]
    %v170 = vlaneseq
    %v171 = vshrl.u32 %v170, 7
    %v172 = vsub.s32 0, %v171
    %v173 = vrot.slane %v169, %v172
    %v178 = vcombine.high %v165, %v165
    %v179 = vcombine.high %v166, %v166
    %v180 = vcombine.high %v167, %v167
    %v181 = vcombine.high %v168, %v168
    %186 = vmatprep.subr.mxu0 0.0
    %187 = vmatpush1.msra.mxu0 %v50
    %188 = vmatprep.subr.mxu0 0.0
    %189 = vmatpush1.msra.mxu0 %v49
    %190 = vmatprep.subr.mxu0 0.0
    %191 = vmatpush1.msra.mxu0 %v48
    %192 = vmatprep.subr.mxu0 0.0
    %193 = vmatpush1.msra.mxu0 %v47
    %194 = vmatprep.subr.mxu0 0.0
    %195 = vmatpush1.msra.mxu0 %v46
    %196 = vmatprep.subr.mxu0 0.0
    %197 = vmatpush1.msra.mxu0 %v45
    %198 = vmatprep.subr.mxu0 0.0
    %199 = vmatpush1.msra.mxu0 %v44
    %200 = vmatprep.subr.mxu0 0.0
    %201 = vmatpush1.msra.mxu0 %v43
    %202 = vmatprep.subr.mxu0 0.0
    %203 = vmatpush1.msra.mxu0 %v42
    %204 = vmatprep.subr.mxu0 0.0
    %205 = vmatpush1.msra.mxu0 %v41
    %206 = vmatprep.subr.mxu0 0.0
    %207 = vmatpush1.msra.mxu0 %v40
    %208 = vmatprep.subr.mxu0 0.0
    %209 = vmatpush1.msra.mxu0 %v39
    %210 = vmatprep.subr.mxu0 0.0
    %211 = vmatpush1.msra.mxu0 %v38
    %212 = vmatprep.subr.mxu0 0.0
    %213 = vmatpush1.msra.mxu0 %v37
    %214 = vmatprep.subr.mxu0 0.0
    %215 = vmatpush1.msra.mxu0 %v36
    %216 = vmatprep.subr.mxu0 0.0
    %217 = vmatpush1.msra.mxu0 %v35
    %218 = vmatprep.subr.mxu0 0.0
    %219 = vmatpush2.msra.mxu0 %v66
    %220 = vmatprep.subr.mxu0 0.0
    %221 = vmatpush2.msra.mxu0 %v65
    %222 = vmatprep.subr.mxu0 0.0
    %223 = vmatpush2.msra.mxu0 %v64
    %224 = vmatprep.subr.mxu0 0.0
    %225 = vmatpush2.msra.mxu0 %v63
    %226 = vmatprep.subr.mxu0 0.0
    %227 = vmatpush2.msra.mxu0 %v62
    %228 = vmatprep.subr.mxu0 0.0
    %229 = vmatpush2.msra.mxu0 %v61
    %230 = vmatprep.subr.mxu0 0.0
    %231 = vmatpush2.msra.mxu0 %v60
    %232 = vmatprep.subr.mxu0 0.0
    %233 = vmatpush2.msra.mxu0 %v59
    %234 = vmatprep.subr.mxu0 0.0
    %235 = vmatpush2.msra.mxu0 %v58
    %236 = vmatprep.subr.mxu0 0.0
    %237 = vmatpush2.msra.mxu0 %v57
    %238 = vmatprep.subr.mxu0 0.0
    %239 = vmatpush2.msra.mxu0 %v56
    %240 = vmatprep.subr.mxu0 0.0
    %241 = vmatpush2.msra.mxu0 %v55
    %242 = vmatprep.subr.mxu0 0.0
    %243 = vmatpush2.msra.mxu0 %v54
    %244 = vmatprep.subr.mxu0 0.0
    %245 = vmatpush2.msra.mxu0 %v53
    %246 = vmatprep.subr.mxu0 0.0
    %247 = vmatpush2.msra.mxu0 %v52
    %248 = vmatprep.subr.mxu0 0.0
    %249 = vmatpush2.msra.mxu0 %v51
    %250 = vmatprep.mubr.f32.mxu0 %v178
    %251 = vmatmul.mubr.f32.gmra.mxu0 %v165
    %v252 = vpop.f32.mrf.mxu0
    %v253 = vadd.f32 %v173, %v252
    %v254 = vpop.f32.mrf.mxu0
    %255 = vdwg.mxu0
    %256 = vmatprep.subr.mxu0 0.0
    %257 = vmatpush1.msra.mxu0 %v82
    %258 = vmatprep.subr.mxu0 0.0
    %259 = vmatpush1.msra.mxu0 %v81
    %260 = vmatprep.subr.mxu0 0.0
    %261 = vmatpush1.msra.mxu0 %v80
    %262 = vmatprep.subr.mxu0 0.0
    %263 = vmatpush1.msra.mxu0 %v79
    %264 = vmatprep.subr.mxu0 0.0
    %265 = vmatpush1.msra.mxu0 %v78
    %266 = vmatprep.subr.mxu0 0.0
    %267 = vmatpush1.msra.mxu0 %v77
    %268 = vmatprep.subr.mxu0 0.0
    %269 = vmatpush1.msra.mxu0 %v76
    %270 = vmatprep.subr.mxu0 0.0
    %271 = vmatpush1.msra.mxu0 %v75
    %272 = vmatprep.subr.mxu0 0.0
    %273 = vmatpush1.msra.mxu0 %v74
    %274 = vmatprep.subr.mxu0 0.0
    %275 = vmatpush1.msra.mxu0 %v73
    %276 = vmatprep.subr.mxu0 0.0
    %277 = vmatpush1.msra.mxu0 %v72
    %278 = vmatprep.subr.mxu0 0.0
    %279 = vmatpush1.msra.mxu0 %v71
    %280 = vmatprep.subr.mxu0 0.0
    %281 = vmatpush1.msra.mxu0 %v70
    %282 = vmatprep.subr.mxu0 0.0
    %283 = vmatpush1.msra.mxu0 %v69
    %284 = vmatprep.subr.mxu0 0.0
    %285 = vmatpush1.msra.mxu0 %v68
    %286 = vmatprep.subr.mxu0 0.0
    %287 = vmatpush1.msra.mxu0 %v67
    %288 = vmatprep.subr.mxu0 0.0
    %289 = vmatpush2.msra.mxu0 %v98
    %290 = vmatprep.subr.mxu0 0.0
    %291 = vmatpush2.msra.mxu0 %v97
    %292 = vmatprep.subr.mxu0 0.0
    %293 = vmatpush2.msra.mxu0 %v96
    %294 = vmatprep.subr.mxu0 0.0
    %295 = vmatpush2.msra.mxu0 %v95
    %296 = vmatprep.subr.mxu0 0.0
    %297 = vmatpush2.msra.mxu0 %v94
    %298 = vmatprep.subr.mxu0 0.0
    %299 = vmatpush2.msra.mxu0 %v93
    %300 = vmatprep.subr.mxu0 0.0
    %301 = vmatpush2.msra.mxu0 %v92
    %302 = vmatprep.subr.mxu0 0.0
    %303 = vmatpush2.msra.mxu0 %v91
    %304 = vmatprep.subr.mxu0 0.0
    %305 = vmatpush2.msra.mxu0 %v90
    %306 = vmatprep.subr.mxu0 0.0
    %307 = vmatpush2.msra.mxu0 %v89
    %308 = vmatprep.subr.mxu0 0.0
    %309 = vmatpush2.msra.mxu0 %v88
    %310 = vmatprep.subr.mxu0 0.0
    %311 = vmatpush2.msra.mxu0 %v87
    %312 = vmatprep.subr.mxu0 0.0
    %313 = vmatpush2.msra.mxu0 %v86
    %314 = vmatprep.subr.mxu0 0.0
    %315 = vmatpush2.msra.mxu0 %v85
    %316 = vmatprep.subr.mxu0 0.0
    %317 = vmatpush2.msra.mxu0 %v84
    %318 = vmatprep.subr.mxu0 0.0
    %319 = vmatpush2.msra.mxu0 %v83
    %320 = vmatprep.mubr.f32.mxu0 %v179
    %321 = vmatmul.mubr.f32.gmra.mxu0 %v166
    %v322 = vpop.f32.mrf.mxu0
    %v323 = vadd.f32 %v253, %v322
    %v324 = vpop.f32.mrf.mxu0
    %325 = vdwg.mxu0
    %326 = vmatprep.subr.mxu0 0.0
    %327 = vmatpush1.msra.mxu0 %v114
    %328 = vmatprep.subr.mxu0 0.0
    %329 = vmatpush1.msra.mxu0 %v113
    %330 = vmatprep.subr.mxu0 0.0
    %331 = vmatpush1.msra.mxu0 %v112
    %332 = vmatprep.subr.mxu0 0.0
    %333 = vmatpush1.msra.mxu0 %v111
    %334 = vmatprep.subr.mxu0 0.0
    %335 = vmatpush1.msra.mxu0 %v110
    %336 = vmatprep.subr.mxu0 0.0
    %337 = vmatpush1.msra.mxu0 %v109
    %338 = vmatprep.subr.mxu0 0.0
    %339 = vmatpush1.msra.mxu0 %v108
    %340 = vmatprep.subr.mxu0 0.0
    %341 = vmatpush1.msra.mxu0 %v107
    %342 = vmatprep.subr.mxu0 0.0
    %343 = vmatpush1.msra.mxu0 %v106
    %344 = vmatprep.subr.mxu0 0.0
    %345 = vmatpush1.msra.mxu0 %v105
    %346 = vmatprep.subr.mxu0 0.0
    %347 = vmatpush1.msra.mxu0 %v104
    %348 = vmatprep.subr.mxu0 0.0
    %349 = vmatpush1.msra.mxu0 %v103
    %350 = vmatprep.subr.mxu0 0.0
    %351 = vmatpush1.msra.mxu0 %v102
    %352 = vmatprep.subr.mxu0 0.0
    %353 = vmatpush1.msra.mxu0 %v101
    %354 = vmatprep.subr.mxu0 0.0
    %355 = vmatpush1.msra.mxu0 %v100
    %356 = vmatprep.subr.mxu0 0.0
    %357 = vmatpush1.msra.mxu0 %v99
    %358 = vmatprep.subr.mxu0 0.0
    %359 = vmatpush2.msra.mxu0 %v130
    %360 = vmatprep.subr.mxu0 0.0
    %361 = vmatpush2.msra.mxu0 %v129
    %362 = vmatprep.subr.mxu0 0.0
    %363 = vmatpush2.msra.mxu0 %v128
    %364 = vmatprep.subr.mxu0 0.0
    %365 = vmatpush2.msra.mxu0 %v127
    %366 = vmatprep.subr.mxu0 0.0
    %367 = vmatpush2.msra.mxu0 %v126
    %368 = vmatprep.subr.mxu0 0.0
    %369 = vmatpush2.msra.mxu0 %v125
    %370 = vmatprep.subr.mxu0 0.0
    %371 = vmatpush2.msra.mxu0 %v124
    %372 = vmatprep.subr.mxu0 0.0
    %373 = vmatpush2.msra.mxu0 %v123
    %374 = vmatprep.subr.mxu0 0.0
    %375 = vmatpush2.msra.mxu0 %v122
    %376 = vmatprep.subr.mxu0 0.0
    %377 = vmatpush2.msra.mxu0 %v121
    %378 = vmatprep.subr.mxu0 0.0
    %379 = vmatpush2.msra.mxu0 %v120
    %380 = vmatprep.subr.mxu0 0.0
    %381 = vmatpush2.msra.mxu0 %v119
    %382 = vmatprep.subr.mxu0 0.0
    %383 = vmatpush2.msra.mxu0 %v118
    %384 = vmatprep.subr.mxu0 0.0
    %385 = vmatpush2.msra.mxu0 %v117
    %386 = vmatprep.subr.mxu0 0.0
    %387 = vmatpush2.msra.mxu0 %v116
    %388 = vmatprep.subr.mxu0 0.0
    %389 = vmatpush2.msra.mxu0 %v115
    %390 = vmatprep.mubr.f32.mxu0 %v180
    %391 = vmatmul.mubr.f32.gmra.mxu0 %v167
    %v392 = vpop.f32.mrf.mxu0
    %v393 = vadd.f32 %v323, %v392
    %v394 = vpop.f32.mrf.mxu0
    %395 = vdwg.mxu0
    %396 = vmatprep.subr.mxu0 0.0
    %397 = vmatpush1.msra.mxu0 %v146
    %398 = vmatprep.subr.mxu0 0.0
    %399 = vmatpush1.msra.mxu0 %v145
    %400 = vmatprep.subr.mxu0 0.0
    %401 = vmatpush1.msra.mxu0 %v144
    %402 = vmatprep.subr.mxu0 0.0
    %403 = vmatpush1.msra.mxu0 %v143
    %404 = vmatprep.subr.mxu0 0.0
    %405 = vmatpush1.msra.mxu0 %v142
    %406 = vmatprep.subr.mxu0 0.0
    %407 = vmatpush1.msra.mxu0 %v141
    %408 = vmatprep.subr.mxu0 0.0
    %409 = vmatpush1.msra.mxu0 %v140
    %410 = vmatprep.subr.mxu0 0.0
    %411 = vmatpush1.msra.mxu0 %v139
    %412 = vmatprep.subr.mxu0 0.0
    %413 = vmatpush1.msra.mxu0 %v138
    %414 = vmatprep.subr.mxu0 0.0
    %415 = vmatpush1.msra.mxu0 %v137
    %416 = vmatprep.subr.mxu0 0.0
    %417 = vmatpush1.msra.mxu0 %v136
    %418 = vmatprep.subr.mxu0 0.0
    %419 = vmatpush1.msra.mxu0 %v135
    %420 = vmatprep.subr.mxu0 0.0
    %421 = vmatpush1.msra.mxu0 %v134
    %422 = vmatprep.subr.mxu0 0.0
    %423 = vmatpush1.msra.mxu0 %v133
    %424 = vmatprep.subr.mxu0 0.0
    %425 = vmatpush1.msra.mxu0 %v132
    %426 = vmatprep.subr.mxu0 0.0
    %427 = vmatpush1.msra.mxu0 %v131
    %428 = vmatprep.subr.mxu0 0.0
    %429 = vmatpush2.msra.mxu0 %v162
    %430 = vmatprep.subr.mxu0 0.0
    %431 = vmatpush2.msra.mxu0 %v161
    %432 = vmatprep.subr.mxu0 0.0
    %433 = vmatpush2.msra.mxu0 %v160
    %434 = vmatprep.subr.mxu0 0.0
    %435 = vmatpush2.msra.mxu0 %v159
    %436 = vmatprep.subr.mxu0 0.0
    %437 = vmatpush2.msra.mxu0 %v158
    %438 = vmatprep.subr.mxu0 0.0
    %439 = vmatpush2.msra.mxu0 %v157
    %440 = vmatprep.subr.mxu0 0.0
    %441 = vmatpush2.msra.mxu0 %v156
    %442 = vmatprep.subr.mxu0 0.0
    %443 = vmatpush2.msra.mxu0 %v155
    %444 = vmatprep.subr.mxu0 0.0
    %445 = vmatpush2.msra.mxu0 %v154
    %446 = vmatprep.subr.mxu0 0.0
    %447 = vmatpush2.msra.mxu0 %v153
    %448 = vmatprep.subr.mxu0 0.0
    %449 = vmatpush2.msra.mxu0 %v152
    %450 = vmatprep.subr.mxu0 0.0
    %451 = vmatpush2.msra.mxu0 %v151
    %452 = vmatprep.subr.mxu0 0.0
    %453 = vmatpush2.msra.mxu0 %v150
    %454 = vmatprep.subr.mxu0 0.0
    %455 = vmatpush2.msra.mxu0 %v149
    %456 = vmatprep.subr.mxu0 0.0
    %457 = vmatpush2.msra.mxu0 %v148
    %458 = vmatprep.subr.mxu0 0.0
    %459 = vmatpush2.msra.mxu0 %v147
    %460 = vmatprep.mubr.f32.mxu0 %v181
    %461 = vmatmul.mubr.f32.gmra.mxu0 %v168
    %v462 = vpop.f32.mrf.mxu0
    %v463 = vadd.f32 %v393, %v462
    %v464 = vpop.f32.mrf.mxu0
    %465 = vdwg.mxu0
    %v466 = vmul.f32 %v463, %v463
    %v467 = vmul.f32 %v463, %v466
    %v468 = vmul.f32 %v467, 0.044715
    %v469 = vadd.f32 %v463, %v468
    %v470 = vmul.f32 %v469, 0.7978846
    %v471 = vtanh.pop %v470
    %v472 = vadd.f32 %v471, 1.0
    %v473 = vmul.f32 %v472, 0.5
    %v474 = vmul.f32 %v463, %v473
    %v475 = vld [vmem:[%s1] sm:$0xff]
    %v476 = vld [vmem:[%s1 + $0x8] sm:$0xff]
    %v477 = vld [vmem:[%s1 + $0x10] sm:$0xff]
    %v478 = vld [vmem:[%s1 + $0x18] sm:$0xff]
    %v479 = vld [vmem:[#allocation2 + $0x591] sm:$0x1]
    %v480 = vlaneseq
    %v481 = vshrl.u32 %v480, 7
    %v482 = vsub.s32 0, %v481
    %v483 = vrot.slane %v479, %v482
    %v488 = vcombine.high %v475, %v475
    %v489 = vcombine.high %v476, %v476
    %v490 = vcombine.high %v477, %v477
    %v491 = vcombine.high %v478, %v478
    %624 = vrot.lane.b32.xlu0 %v35, 96
    %v625 = vpop.permute.xlu0 %624
    %626 = vrot.lane.b32.xlu0 %v36, 96
    %v627 = vpop.permute.xlu0 %626
    %628 = vrot.lane.b32.xlu0 %v37, 96
    %v629 = vpop.permute.xlu0 %628
    %630 = vrot.lane.b32.xlu0 %v38, 96
    %v631 = vpop.permute.xlu0 %630
    %632 = vrot.lane.b32.xlu0 %v39, 96
    %v633 = vpop.permute.xlu0 %632
    %634 = vrot.lane.b32.xlu0 %v40, 96
    %v635 = vpop.permute.xlu0 %634
    %636 = vrot.lane.b32.xlu0 %v41, 96
    %v637 = vpop.permute.xlu0 %636
    %638 = vrot.lane.b32.xlu0 %v42, 96
    %v639 = vpop.permute.xlu0 %638
    %640 = vrot.lane.b32.xlu0 %v43, 96
    %v641 = vpop.permute.xlu0 %640
    %642 = vrot.lane.b32.xlu0 %v44, 96
    %v643 = vpop.permute.xlu0 %642
    %644 = vrot.lane.b32.xlu0 %v45, 96
    %v645 = vpop.permute.xlu0 %644
    %646 = vrot.lane.b32.xlu0 %v46, 96
    %v647 = vpop.permute.xlu0 %646
    %648 = vrot.lane.b32.xlu0 %v47, 96
    %v649 = vpop.permute.xlu0 %648
    %650 = vrot.lane.b32.xlu0 %v48, 96
    %v651 = vpop.permute.xlu0 %650
    %652 = vrot.lane.b32.xlu0 %v49, 96
    %v653 = vpop.permute.xlu0 %652
    %654 = vrot.lane.b32.xlu0 %v50, 96
    %v655 = vpop.permute.xlu0 %654
    %656 = vrot.lane.b32.xlu0 %v51, 96
    %v657 = vpop.permute.xlu0 %656
    %658 = vrot.lane.b32.xlu0 %v52, 96
    %v659 = vpop.permute.xlu0 %658
    %660 = vrot.lane.b32.xlu0 %v53, 96
    %v661 = vpop.permute.xlu0 %660
    %662 = vrot.lane.b32.xlu0 %v54, 96
    %v663 = vpop.permute.xlu0 %662
    %664 = vrot.lane.b32.xlu0 %v55, 96
    %v665 = vpop.permute.xlu0 %664
    %666 = vrot.lane.b32.xlu0 %v56, 96
    %v667 = vpop.permute.xlu0 %666
    %668 = vrot.lane.b32.xlu0 %v57, 96
    %v669 = vpop.permute.xlu0 %668
    %670 = vrot.lane.b32.xlu0 %v58, 96
    %v671 = vpop.permute.xlu0 %670
    %672 = vrot.lane.b32.xlu0 %v59, 96
    %v673 = vpop.permute.xlu0 %672
    %674 = vrot.lane.b32.xlu0 %v60, 96
    %v675 = vpop.permute.xlu0 %674
    %676 = vrot.lane.b32.xlu0 %v61, 96
    %v677 = vpop.permute.xlu0 %676
    %678 = vrot.lane.b32.xlu0 %v62, 96
    %v679 = vpop.permute.xlu0 %678
    %680 = vrot.lane.b32.xlu0 %v63, 96
    %v681 = vpop.permute.xlu0 %680
    %682 = vrot.lane.b32.xlu0 %v64, 96
    %v683 = vpop.permute.xlu0 %682
    %684 = vrot.lane.b32.xlu0 %v65, 96
    %v685 = vpop.permute.xlu0 %684
    %686 = vrot.lane.b32.xlu0 %v66, 96
    %v687 = vpop.permute.xlu0 %686
    %688 = vrot.lane.b32.xlu0 %v67, 96
    %v689 = vpop.permute.xlu0 %688
    %690 = vrot.lane.b32.xlu0 %v68, 96
    %v691 = vpop.permute.xlu0 %690
    %692 = vrot.lane.b32.xlu0 %v69, 96
    %v693 = vpop.permute.xlu0 %692
    %694 = vrot.lane.b32.xlu0 %v70, 96
    %v695 = vpop.permute.xlu0 %694
    %696 = vrot.lane.b32.xlu0 %v71, 96
    %v697 = vpop.permute.xlu0 %696
    %698 = vrot.lane.b32.xlu0 %v72, 96
    %v699 = vpop.permute.xlu0 %698
    %700 = vrot.lane.b32.xlu0 %v73, 96
    %v701 = vpop.permute.xlu0 %700
    %702 = vrot.lane.b32.xlu0 %v74, 96
    %v703 = vpop.permute.xlu0 %702
    %704 = vrot.lane.b32.xlu0 %v75, 96
    %v705 = vpop.permute.xlu0 %704
    %706 = vrot.lane.b32.xlu0 %v76, 96
    %v707 = vpop.permute.xlu0 %706
    %708 = vrot.lane.b32.xlu0 %v77, 96
    %v709 = vpop.permute.xlu0 %708
    %710 = vrot.lane.b32.xlu0 %v78, 96
    %v711 = vpop.permute.xlu0 %710
    %712 = vrot.lane.b32.xlu0 %v79, 96
    %v713 = vpop.permute.xlu0 %712
    %714 = vrot.lane.b32.xlu0 %v80, 96
    %v715 = vpop.permute.xlu0 %714
    %716 = vrot.lane.b32.xlu0 %v81, 96
    %v717 = vpop.permute.xlu0 %716
    %718 = vrot.lane.b32.xlu0 %v82, 96
    %v719 = vpop.permute.xlu0 %718
    %720 = vrot.lane.b32.xlu0 %v83, 96
    %v721 = vpop.permute.xlu0 %720
    %722 = vrot.lane.b32.xlu0 %v84, 96
    %v723 = vpop.permute.xlu0 %722
    %724 = vrot.lane.b32.xlu0 %v85, 96
    %v725 = vpop.permute.xlu0 %724
    %726 = vrot.lane.b32.xlu0 %v86, 96
    %v727 = vpop.permute.xlu0 %726
    %728 = vrot.lane.b32.xlu0 %v87, 96
    %v729 = vpop.permute.xlu0 %728
    %730 = vrot.lane.b32.xlu0 %v88, 96
    %v731 = vpop.permute.xlu0 %730
    %732 = vrot.lane.b32.xlu0 %v89, 96
    %v733 = vpop.permute.xlu0 %732
    %734 = vrot.lane.b32.xlu0 %v90, 96
    %v735 = vpop.permute.xlu0 %734
    %736 = vrot.lane.b32.xlu0 %v91, 96
    %v737 = vpop.permute.xlu0 %736
    %738 = vrot.lane.b32.xlu0 %v92, 96
    %v739 = vpop.permute.xlu0 %738
    %740 = vrot.lane.b32.xlu0 %v93, 96
    %v741 = vpop.permute.xlu0 %740
    %742 = vrot.lane.b32.xlu0 %v94, 96
    %v743 = vpop.permute.xlu0 %742
    %744 = vrot.lane.b32.xlu0 %v95, 96
    %v745 = vpop.permute.xlu0 %744
    %746 = vrot.lane.b32.xlu0 %v96, 96
    %v747 = vpop.permute.xlu0 %746
    %748 = vrot.lane.b32.xlu0 %v97, 96
    %v749 = vpop.permute.xlu0 %748
    %750 = vrot.lane.b32.xlu0 %v98, 96
    %v751 = vpop.permute.xlu0 %750
    %752 = vrot.lane.b32.xlu0 %v99, 96
    %v753 = vpop.permute.xlu0 %752
    %754 = vrot.lane.b32.xlu0 %v100, 96
    %v755 = vpop.permute.xlu0 %754
    %756 = vrot.lane.b32.xlu0 %v101, 96
    %v757 = vpop.permute.xlu0 %756
    %758 = vrot.lane.b32.xlu0 %v102, 96
    %v759 = vpop.permute.xlu0 %758
    %760 = vrot.lane.b32.xlu0 %v103, 96
    %v761 = vpop.permute.xlu0 %760
    %762 = vrot.lane.b32.xlu0 %v104, 96
    %v763 = vpop.permute.xlu0 %762
    %764 = vrot.lane.b32.xlu0 %v105, 96
    %v765 = vpop.permute.xlu0 %764
    %766 = vrot.lane.b32.xlu0 %v106, 96
    %v767 = vpop.permute.xlu0 %766
    %768 = vrot.lane.b32.xlu0 %v107, 96
    %v769 = vpop.permute.xlu0 %768
    %770 = vrot.lane.b32.xlu0 %v108, 96
    %v771 = vpop.permute.xlu0 %770
    %772 = vrot.lane.b32.xlu0 %v109, 96
    %v773 = vpop.permute.xlu0 %772
    %774 = vrot.lane.b32.xlu0 %v110, 96
    %v775 = vpop.permute.xlu0 %774
    %776 = vrot.lane.b32.xlu0 %v111, 96
    %v777 = vpop.permute.xlu0 %776
    %778 = vrot.lane.b32.xlu0 %v112, 96
    %v779 = vpop.permute.xlu0 %778
    %780 = vrot.lane.b32.xlu0 %v113, 96
    %v781 = vpop.permute.xlu0 %780
    %782 = vrot.lane.b32.xlu0 %v114, 96
    %v783 = vpop.permute.xlu0 %782
    %784 = vrot.lane.b32.xlu0 %v115, 96
    %v785 = vpop.permute.xlu0 %784
    %786 = vrot.lane.b32.xlu0 %v116, 96
    %v787 = vpop.permute.xlu0 %786
    %788 = vrot.lane.b32.xlu0 %v117, 96
    %v789 = vpop.permute.xlu0 %788
    %790 = vrot.lane.b32.xlu0 %v118, 96
    %v791 = vpop.permute.xlu0 %790
    %792 = vrot.lane.b32.xlu0 %v119, 96
    %v793 = vpop.permute.xlu0 %792
    %794 = vrot.lane.b32.xlu0 %v120, 96
    %v795 = vpop.permute.xlu0 %794
    %796 = vrot.lane.b32.xlu0 %v121, 96
    %v797 = vpop.permute.xlu0 %796
    %798 = vrot.lane.b32.xlu0 %v122, 96
    %v799 = vpop.permute.xlu0 %798
    %800 = vrot.lane.b32.xlu0 %v123, 96
    %v801 = vpop.permute.xlu0 %800
    %802 = vrot.lane.b32.xlu0 %v124, 96
    %v803 = vpop.permute.xlu0 %802
    %804 = vrot.lane.b32.xlu0 %v125, 96
    %v805 = vpop.permute.xlu0 %804
    %806 = vrot.lane.b32.xlu0 %v126, 96
    %v807 = vpop.permute.xlu0 %806
    %808 = vrot.lane.b32.xlu0 %v127, 96
    %v809 = vpop.permute.xlu0 %808
    %810 = vrot.lane.b32.xlu0 %v128, 96
    %v811 = vpop.permute.xlu0 %810
    %812 = vrot.lane.b32.xlu0 %v129, 96
    %v813 = vpop.permute.xlu0 %812
    %814 = vrot.lane.b32.xlu0 %v130, 96
    %v815 = vpop.permute.xlu0 %814
    %816 = vrot.lane.b32.xlu0 %v131, 96
    %v817 = vpop.permute.xlu0 %816
    %818 = vrot.lane.b32.xlu0 %v132, 96
    %v819 = vpop.permute.xlu0 %818
    %820 = vrot.lane.b32.xlu0 %v133, 96
    %v821 = vpop.permute.xlu0 %820
    %822 = vrot.lane.b32.xlu0 %v134, 96
    %v823 = vpop.permute.xlu0 %822
    %824 = vrot.lane.b32.xlu0 %v135, 96
    %v825 = vpop.permute.xlu0 %824
    %826 = vrot.lane.b32.xlu0 %v136, 96
    %v827 = vpop.permute.xlu0 %826
    %828 = vrot.lane.b32.xlu0 %v137, 96
    %v829 = vpop.permute.xlu0 %828
    %830 = vrot.lane.b32.xlu0 %v138, 96
    %v831 = vpop.permute.xlu0 %830
    %832 = vrot.lane.b32.xlu0 %v139, 96
    %v833 = vpop.permute.xlu0 %832
    %834 = vrot.lane.b32.xlu0 %v140, 96
    %v835 = vpop.permute.xlu0 %834
    %836 = vrot.lane.b32.xlu0 %v141, 96
    %v837 = vpop.permute.xlu0 %836
    %838 = vrot.lane.b32.xlu0 %v142, 96
    %v839 = vpop.permute.xlu0 %838
    %840 = vrot.lane.b32.xlu0 %v143, 96
    %v841 = vpop.permute.xlu0 %840
    %842 = vrot.lane.b32.xlu0 %v144, 96
    %v843 = vpop.permute.xlu0 %842
    %844 = vrot.lane.b32.xlu0 %v145, 96
    %v845 = vpop.permute.xlu0 %844
    %846 = vrot.lane.b32.xlu0 %v146, 96
    %v847 = vpop.permute.xlu0 %846
    %848 = vrot.lane.b32.xlu0 %v147, 96
    %v849 = vpop.permute.xlu0 %848
    %850 = vrot.lane.b32.xlu0 %v148, 96
    %v851 = vpop.permute.xlu0 %850
    %852 = vrot.lane.b32.xlu0 %v149, 96
    %v853 = vpop.permute.xlu0 %852
    %854 = vrot.lane.b32.xlu0 %v150, 96
    %v855 = vpop.permute.xlu0 %854
    %856 = vrot.lane.b32.xlu0 %v151, 96
    %v857 = vpop.permute.xlu0 %856
    %858 = vrot.lane.b32.xlu0 %v152, 96
    %v859 = vpop.permute.xlu0 %858
    %860 = vrot.lane.b32.xlu0 %v153, 96
    %v861 = vpop.permute.xlu0 %860
    %862 = vrot.lane.b32.xlu0 %v154, 96
    %v863 = vpop.permute.xlu0 %862
    %864 = vrot.lane.b32.xlu0 %v155, 96
    %v865 = vpop.permute.xlu0 %864
    %866 = vrot.lane.b32.xlu0 %v156, 96
    %v867 = vpop.permute.xlu0 %866
    %868 = vrot.lane.b32.xlu0 %v157, 96
    %v869 = vpop.permute.xlu0 %868
    %870 = vrot.lane.b32.xlu0 %v158, 96
    %v871 = vpop.permute.xlu0 %870
    %872 = vrot.lane.b32.xlu0 %v159, 96
    %v873 = vpop.permute.xlu0 %872
    %874 = vrot.lane.b32.xlu0 %v160, 96
    %v875 = vpop.permute.xlu0 %874
    %876 = vrot.lane.b32.xlu0 %v161, 96
    %v877 = vpop.permute.xlu0 %876
    %878 = vrot.lane.b32.xlu0 %v162, 96
    %v879 = vpop.permute.xlu0 %878
    %1008 = vmatprep.subr.mxu0 0.0
    %1009 = vmatpush1.msra.mxu0 %v655
    %1010 = vmatprep.subr.mxu0 0.0
    %1011 = vmatpush1.msra.mxu0 %v653
    %1012 = vmatprep.subr.mxu0 0.0
    %1013 = vmatpush1.msra.mxu0 %v651
    %1014 = vmatprep.subr.mxu0 0.0
    %1015 = vmatpush1.msra.mxu0 %v649
    %1016 = vmatprep.subr.mxu0 0.0
    %1017 = vmatpush1.msra.mxu0 %v647
    %1018 = vmatprep.subr.mxu0 0.0
    %1019 = vmatpush1.msra.mxu0 %v645
    %1020 = vmatprep.subr.mxu0 0.0
    %1021 = vmatpush1.msra.mxu0 %v643
    %1022 = vmatprep.subr.mxu0 0.0
    %1023 = vmatpush1.msra.mxu0 %v641
    %1024 = vmatprep.subr.mxu0 0.0
    %1025 = vmatpush1.msra.mxu0 %v639
    %1026 = vmatprep.subr.mxu0 0.0
    %1027 = vmatpush1.msra.mxu0 %v637
    %1028 = vmatprep.subr.mxu0 0.0
    %1029 = vmatpush1.msra.mxu0 %v635
    %1030 = vmatprep.subr.mxu0 0.0
    %1031 = vmatpush1.msra.mxu0 %v633
    %1032 = vmatprep.subr.mxu0 0.0
    %1033 = vmatpush1.msra.mxu0 %v631
    %1034 = vmatprep.subr.mxu0 0.0
    %1035 = vmatpush1.msra.mxu0 %v629
    %1036 = vmatprep.subr.mxu0 0.0
    %1037 = vmatpush1.msra.mxu0 %v627
    %1038 = vmatprep.subr.mxu0 0.0
    %1039 = vmatpush1.msra.mxu0 %v625
    %1040 = vmatprep.subr.mxu0 0.0
    %1041 = vmatpush2.msra.mxu0 %v687
    %1042 = vmatprep.subr.mxu0 0.0
    %1043 = vmatpush2.msra.mxu0 %v685
    %1044 = vmatprep.subr.mxu0 0.0
    %1045 = vmatpush2.msra.mxu0 %v683
    %1046 = vmatprep.subr.mxu0 0.0
    %1047 = vmatpush2.msra.mxu0 %v681
    %1048 = vmatprep.subr.mxu0 0.0
    %1049 = vmatpush2.msra.mxu0 %v679
    %1050 = vmatprep.subr.mxu0 0.0
    %1051 = vmatpush2.msra.mxu0 %v677
    %1052 = vmatprep.subr.mxu0 0.0
    %1053 = vmatpush2.msra.mxu0 %v675
    %1054 = vmatprep.subr.mxu0 0.0
    %1055 = vmatpush2.msra.mxu0 %v673
    %1056 = vmatprep.subr.mxu0 0.0
    %1057 = vmatpush2.msra.mxu0 %v671
    %1058 = vmatprep.subr.mxu0 0.0
    %1059 = vmatpush2.msra.mxu0 %v669
    %1060 = vmatprep.subr.mxu0 0.0
    %1061 = vmatpush2.msra.mxu0 %v667
    %1062 = vmatprep.subr.mxu0 0.0
    %1063 = vmatpush2.msra.mxu0 %v665
    %1064 = vmatprep.subr.mxu0 0.0
    %1065 = vmatpush2.msra.mxu0 %v663
    %1066 = vmatprep.subr.mxu0 0.0
    %1067 = vmatpush2.msra.mxu0 %v661
    %1068 = vmatprep.subr.mxu0 0.0
    %1069 = vmatpush2.msra.mxu0 %v659
    %1070 = vmatprep.subr.mxu0 0.0
    %1071 = vmatpush2.msra.mxu0 %v657
    %1072 = vmatprep.mubr.f32.mxu0 %v488
    %1073 = vmatmul.mubr.f32.gmra.mxu0 %v475
    %v1074 = vpop.f32.mrf.mxu0
    %v1075 = vadd.f32 %v483, %v1074
    %v1076 = vpop.f32.mrf.mxu0
    %1077 = vdwg.mxu0
    %1078 = vmatprep.subr.mxu0 0.0
    %1079 = vmatpush1.msra.mxu0 %v719
    %1080 = vmatprep.subr.mxu0 0.0
    %1081 = vmatpush1.msra.mxu0 %v717
    %1082 = vmatprep.subr.mxu0 0.0
    %1083 = vmatpush1.msra.mxu0 %v715
    %1084 = vmatprep.subr.mxu0 0.0
    %1085 = vmatpush1.msra.mxu0 %v713
    %1086 = vmatprep.subr.mxu0 0.0
    %1087 = vmatpush1.msra.mxu0 %v711
    %1088 = vmatprep.subr.mxu0 0.0
    %1089 = vmatpush1.msra.mxu0 %v709
    %1090 = vmatprep.subr.mxu0 0.0
    %1091 = vmatpush1.msra.mxu0 %v707
    %1092 = vmatprep.subr.mxu0 0.0
    %1093 = vmatpush1.msra.mxu0 %v705
    %1094 = vmatprep.subr.mxu0 0.0
    %1095 = vmatpush1.msra.mxu0 %v703
    %1096 = vmatprep.subr.mxu0 0.0
    %1097 = vmatpush1.msra.mxu0 %v701
    %1098 = vmatprep.subr.mxu0 0.0
    %1099 = vmatpush1.msra.mxu0 %v699
    %1100 = vmatprep.subr.mxu0 0.0
    %1101 = vmatpush1.msra.mxu0 %v697
    %1102 = vmatprep.subr.mxu0 0.0
    %1103 = vmatpush1.msra.mxu0 %v695
    %1104 = vmatprep.subr.mxu0 0.0
    %1105 = vmatpush1.msra.mxu0 %v693
    %1106 = vmatprep.subr.mxu0 0.0
    %1107 = vmatpush1.msra.mxu0 %v691
    %1108 = vmatprep.subr.mxu0 0.0
    %1109 = vmatpush1.msra.mxu0 %v689
    %1110 = vmatprep.subr.mxu0 0.0
    %1111 = vmatpush2.msra.mxu0 %v751
    %1112 = vmatprep.subr.mxu0 0.0
    %1113 = vmatpush2.msra.mxu0 %v749
    %1114 = vmatprep.subr.mxu0 0.0
    %1115 = vmatpush2.msra.mxu0 %v747
    %1116 = vmatprep.subr.mxu0 0.0
    %1117 = vmatpush2.msra.mxu0 %v745
    %1118 = vmatprep.subr.mxu0 0.0
    %1119 = vmatpush2.msra.mxu0 %v743
    %1120 = vmatprep.subr.mxu0 0.0
    %1121 = vmatpush2.msra.mxu0 %v741
    %1122 = vmatprep.subr.mxu0 0.0
    %1123 = vmatpush2.msra.mxu0 %v739
    %1124 = vmatprep.subr.mxu0 0.0
    %1125 = vmatpush2.msra.mxu0 %v737
    %1126 = vmatprep.subr.mxu0 0.0
    %1127 = vmatpush2.msra.mxu0 %v735
    %1128 = vmatprep.subr.mxu0 0.0
    %1129 = vmatpush2.msra.mxu0 %v733
    %1130 = vmatprep.subr.mxu0 0.0
    %1131 = vmatpush2.msra.mxu0 %v731
    %1132 = vmatprep.subr.mxu0 0.0
    %1133 = vmatpush2.msra.mxu0 %v729
    %1134 = vmatprep.subr.mxu0 0.0
    %1135 = vmatpush2.msra.mxu0 %v727
    %1136 = vmatprep.subr.mxu0 0.0
    %1137 = vmatpush2.msra.mxu0 %v725
    %1138 = vmatprep.subr.mxu0 0.0
    %1139 = vmatpush2.msra.mxu0 %v723
    %1140 = vmatprep.subr.mxu0 0.0
    %1141 = vmatpush2.msra.mxu0 %v721
    %1142 = vmatprep.mubr.f32.mxu0 %v489
    %1143 = vmatmul.mubr.f32.gmra.mxu0 %v476
    %v1144 = vpop.f32.mrf.mxu0
    %v1145 = vadd.f32 %v1075, %v1144
    %v1146 = vpop.f32.mrf.mxu0
    %1147 = vdwg.mxu0
    %1148 = vmatprep.subr.mxu0 0.0
    %1149 = vmatpush1.msra.mxu0 %v783
    %1150 = vmatprep.subr.mxu0 0.0
    %1151 = vmatpush1.msra.mxu0 %v781
    %1152 = vmatprep.subr.mxu0 0.0
    %1153 = vmatpush1.msra.mxu0 %v779
    %1154 = vmatprep.subr.mxu0 0.0
    %1155 = vmatpush1.msra.mxu0 %v777
    %1156 = vmatprep.subr.mxu0 0.0
    %1157 = vmatpush1.msra.mxu0 %v775
    %1158 = vmatprep.subr.mxu0 0.0
    %1159 = vmatpush1.msra.mxu0 %v773
    %1160 = vmatprep.subr.mxu0 0.0
    %1161 = vmatpush1.msra.mxu0 %v771
    %1162 = vmatprep.subr.mxu0 0.0
    %1163 = vmatpush1.msra.mxu0 %v769
    %1164 = vmatprep.subr.mxu0 0.0
    %1165 = vmatpush1.msra.mxu0 %v767
    %1166 = vmatprep.subr.mxu0 0.0
    %1167 = vmatpush1.msra.mxu0 %v765
    %1168 = vmatprep.subr.mxu0 0.0
    %1169 = vmatpush1.msra.mxu0 %v763
    %1170 = vmatprep.subr.mxu0 0.0
    %1171 = vmatpush1.msra.mxu0 %v761
    %1172 = vmatprep.subr.mxu0 0.0
    %1173 = vmatpush1.msra.mxu0 %v759
    %1174 = vmatprep.subr.mxu0 0.0
    %1175 = vmatpush1.msra.mxu0 %v757
    %1176 = vmatprep.subr.mxu0 0.0
    %1177 = vmatpush1.msra.mxu0 %v755
    %1178 = vmatprep.subr.mxu0 0.0
    %1179 = vmatpush1.msra.mxu0 %v753
    %1180 = vmatprep.subr.mxu0 0.0
    %1181 = vmatpush2.msra.mxu0 %v815
    %1182 = vmatprep.subr.mxu0 0.0
    %1183 = vmatpush2.msra.mxu0 %v813
    %1184 = vmatprep.subr.mxu0 0.0
    %1185 = vmatpush2.msra.mxu0 %v811
    %1186 = vmatprep.subr.mxu0 0.0
    %1187 = vmatpush2.msra.mxu0 %v809
    %1188 = vmatprep.subr.mxu0 0.0
    %1189 = vmatpush2.msra.mxu0 %v807
    %1190 = vmatprep.subr.mxu0 0.0
    %1191 = vmatpush2.msra.mxu0 %v805
    %1192 = vmatprep.subr.mxu0 0.0
    %1193 = vmatpush2.msra.mxu0 %v803
    %1194 = vmatprep.subr.mxu0 0.0
    %1195 = vmatpush2.msra.mxu0 %v801
    %1196 = vmatprep.subr.mxu0 0.0
    %1197 = vmatpush2.msra.mxu0 %v799
    %1198 = vmatprep.subr.mxu0 0.0
    %1199 = vmatpush2.msra.mxu0 %v797
    %1200 = vmatprep.subr.mxu0 0.0
    %1201 = vmatpush2.msra.mxu0 %v795
    %1202 = vmatprep.subr.mxu0 0.0
    %1203 = vmatpush2.msra.mxu0 %v793
    %1204 = vmatprep.subr.mxu0 0.0
    %1205 = vmatpush2.msra.mxu0 %v791
    %1206 = vmatprep.subr.mxu0 0.0
    %1207 = vmatpush2.msra.mxu0 %v789
    %1208 = vmatprep.subr.mxu0 0.0
    %1209 = vmatpush2.msra.mxu0 %v787
    %1210 = vmatprep.subr.mxu0 0.0
    %1211 = vmatpush2.msra.mxu0 %v785
    %1212 = vmatprep.mubr.f32.mxu0 %v490
    %1213 = vmatmul.mubr.f32.gmra.mxu0 %v477
    %v1214 = vpop.f32.mrf.mxu0
    %v1215 = vadd.f32 %v1145, %v1214
    %v1216 = vpop.f32.mrf.mxu0
    %1217 = vdwg.mxu0
    %1218 = vmatprep.subr.mxu0 0.0
    %1219 = vmatpush1.msra.mxu0 %v847
    %1220 = vmatprep.subr.mxu0 0.0
    %1221 = vmatpush1.msra.mxu0 %v845
    %1222 = vmatprep.subr.mxu0 0.0
    %1223 = vmatpush1.msra.mxu0 %v843
    %1224 = vmatprep.subr.mxu0 0.0
    %1225 = vmatpush1.msra.mxu0 %v841
    %1226 = vmatprep.subr.mxu0 0.0
    %1227 = vmatpush1.msra.mxu0 %v839
    %1228 = vmatprep.subr.mxu0 0.0
    %1229 = vmatpush1.msra.mxu0 %v837
    %1230 = vmatprep.subr.mxu0 0.0
    %1231 = vmatpush1.msra.mxu0 %v835
    %1232 = vmatprep.subr.mxu0 0.0
    %1233 = vmatpush1.msra.mxu0 %v833
    %1234 = vmatprep.subr.mxu0 0.0
    %1235 = vmatpush1.msra.mxu0 %v831
    %1236 = vmatprep.subr.mxu0 0.0
    %1237 = vmatpush1.msra.mxu0 %v829
    %1238 = vmatprep.subr.mxu0 0.0
    %1239 = vmatpush1.msra.mxu0 %v827
    %1240 = vmatprep.subr.mxu0 0.0
    %1241 = vmatpush1.msra.mxu0 %v825
    %1242 = vmatprep.subr.mxu0 0.0
    %1243 = vmatpush1.msra.mxu0 %v823
    %1244 = vmatprep.subr.mxu0 0.0
    %1245 = vmatpush1.msra.mxu0 %v821
    %1246 = vmatprep.subr.mxu0 0.0
    %1247 = vmatpush1.msra.mxu0 %v819
    %1248 = vmatprep.subr.mxu0 0.0
    %1249 = vmatpush1.msra.mxu0 %v817
    %1250 = vmatprep.subr.mxu0 0.0
    %1251 = vmatpush2.msra.mxu0 %v879
    %1252 = vmatprep.subr.mxu0 0.0
    %1253 = vmatpush2.msra.mxu0 %v877
    %1254 = vmatprep.subr.mxu0 0.0
    %1255 = vmatpush2.msra.mxu0 %v875
    %1256 = vmatprep.subr.mxu0 0.0
    %1257 = vmatpush2.msra.mxu0 %v873
    %1258 = vmatprep.subr.mxu0 0.0
    %1259 = vmatpush2.msra.mxu0 %v871
    %1260 = vmatprep.subr.mxu0 0.0
    %1261 = vmatpush2.msra.mxu0 %v869
    %1262 = vmatprep.subr.mxu0 0.0
    %1263 = vmatpush2.msra.mxu0 %v867
    %1264 = vmatprep.subr.mxu0 0.0
    %1265 = vmatpush2.msra.mxu0 %v865
    %1266 = vmatprep.subr.mxu0 0.0
    %1267 = vmatpush2.msra.mxu0 %v863
    %1268 = vmatprep.subr.mxu0 0.0
    %1269 = vmatpush2.msra.mxu0 %v861
    %1270 = vmatprep.subr.mxu0 0.0
    %1271 = vmatpush2.msra.mxu0 %v859
    %1272 = vmatprep.subr.mxu0 0.0
    %1273 = vmatpush2.msra.mxu0 %v857
    %1274 = vmatprep.subr.mxu0 0.0
    %1275 = vmatpush2.msra.mxu0 %v855
    %1276 = vmatprep.subr.mxu0 0.0
    %1277 = vmatpush2.msra.mxu0 %v853
    %1278 = vmatprep.subr.mxu0 0.0
    %1279 = vmatpush2.msra.mxu0 %v851
    %1280 = vmatprep.subr.mxu0 0.0
    %1281 = vmatpush2.msra.mxu0 %v849
    %1282 = vmatprep.mubr.f32.mxu0 %v491
    %1283 = vmatmul.mubr.f32.gmra.mxu0 %v478
    %v1284 = vpop.f32.mrf.mxu0
    %v1285 = vadd.f32 %v1215, %v1284
    %v1286 = vpop.f32.mrf.mxu0
    %1287 = vdwg.mxu0
    %v1288 = vmul.f32 %v1285, %v1285
    %v1289 = vmul.f32 %v1285, %v1288
    %v1290 = vmul.f32 %v1289, 0.044715
    %v1291 = vadd.f32 %v1285, %v1290
    %v1292 = vmul.f32 %v1291, 0.7978846
    %v1293 = vtanh.pop %v1292
    %v1294 = vadd.f32 %v1293, 1.0
    %v1295 = vmul.f32 %v1294, 0.5
    %v1296 = vmul.f32 %v1285, %v1295
    %v1297 = vld [vmem:[%s2] sm:$0xf]
    %v1298 = vld [vmem:[#allocation2 + $0x592] sm:$0x1]
    %v1299 = vlaneseq
    %v1300 = vshrl.u32 %v1299, 7
    %v1301 = vsub.s32 0, %v1300
    %v1302 = vrot.slane %v1298, %v1301
    %vm1303 = vcmask 80896
    %v1305 = vsel %vm1303, %v1297, 0
    %vm1307 = vcmask 1041408
    %v1309 = vsel %vm1307, %v164, 0
    %1311 = vmatprep.subr.mxu0 0.0
    %1312 = vmatpush1.msra.mxu0 0.0
    %1313 = vmatprep.subr.mxu0 0.0
    %1314 = vmatpush1.msra.mxu0 0.0
    %1315 = vmatprep.subr.mxu0 0.0
    %1316 = vmatpush1.msra.mxu0 0.0
    %1317 = vmatprep.subr.mxu0 0.0
    %1318 = vmatpush1.msra.mxu0 0.0
    %1319 = vmatprep.subr.mxu0 0.0
    %1320 = vmatpush1.msra.mxu0 0.0
    %1321 = vmatprep.subr.mxu0 0.0
    %1322 = vmatpush1.msra.mxu0 0.0
    %1323 = vmatprep.subr.mxu0 0.0
    %1324 = vmatpush1.msra.mxu0 0.0
    %1325 = vmatprep.subr.mxu0 0.0
    %1326 = vmatpush1.msra.mxu0 0.0
    %1327 = vmatprep.subr.mxu0 0.0
    %1328 = vmatpush1.msra.mxu0 0.0
    %1329 = vmatprep.subr.mxu0 0.0
    %1330 = vmatpush1.msra.mxu0 0.0
    %1331 = vmatprep.subr.mxu0 0.0
    %1332 = vmatpush1.msra.mxu0 0.0
    %1333 = vmatprep.subr.mxu0 0.0
    %1334 = vmatpush1.msra.mxu0 0.0
    %1335 = vmatprep.subr.mxu0 0.0
    %1336 = vmatpush1.msra.mxu0 0.0
    %1337 = vmatprep.subr.mxu0 0.0
    %1338 = vmatpush1.msra.mxu0 0.0
    %1339 = vmatprep.subr.mxu0 0.0
    %1340 = vmatpush1.msra.mxu0 %v1309
    %1341 = vmatprep.subr.mxu0 0.0
    %1342 = vmatpush1.msra.mxu0 %v163
    %1343 = vmatprep.subr.mxu0 0.0
    %1344 = vmatpush2.msra.mxu0 0.0
    %1345 = vmatprep.subr.mxu0 0.0
    %1346 = vmatpush2.msra.mxu0 0.0
    %1347 = vmatprep.subr.mxu0 0.0
    %1348 = vmatpush2.msra.mxu0 0.0
    %1349 = vmatprep.subr.mxu0 0.0
    %1350 = vmatpush2.msra.mxu0 0.0
    %1351 = vmatprep.subr.mxu0 0.0
    %1352 = vmatpush2.msra.mxu0 0.0
    %1353 = vmatprep.subr.mxu0 0.0
    %1354 = vmatpush2.msra.mxu0 0.0
    %1355 = vmatprep.subr.mxu0 0.0
    %1356 = vmatpush2.msra.mxu0 0.0
    %1357 = vmatprep.subr.mxu0 0.0
    %1358 = vmatpush2.msra.mxu0 0.0
    %1359 = vmatprep.subr.mxu0 0.0
    %1360 = vmatpush2.msra.mxu0 0.0
    %1361 = vmatprep.subr.mxu0 0.0
    %1362 = vmatpush2.msra.mxu0 0.0
    %1363 = vmatprep.subr.mxu0 0.0
    %1364 = vmatpush2.msra.mxu0 0.0
    %1365 = vmatprep.subr.mxu0 0.0
    %1366 = vmatpush2.msra.mxu0 0.0
    %1367 = vmatprep.subr.mxu0 0.0
    %1368 = vmatpush2.msra.mxu0 0.0
    %1369 = vmatprep.subr.mxu0 0.0
    %1370 = vmatpush2.msra.mxu0 0.0
    %1371 = vmatprep.subr.mxu0 0.0
    %1372 = vmatpush2.msra.mxu0 0.0
    %1373 = vmatprep.subr.mxu0 0.0
    %1374 = vmatpush2.msra.mxu0 0.0
    %1375 = vmatprep.mubr.f32.mxu0 0.0
    %1376 = vmatmul.mubr.f32.gmra.mxu0 %v1305
    %v1377 = vpop.f32.mrf.mxu0
    %v1378 = vadd.f32 %v1302, %v1377
    %v1379 = vpop.f32.mrf.mxu0
    %1380 = vdwg.mxu0
    %v1381 = vmul.f32 %v1378, %v1378
    %v1382 = vmul.f32 %v1378, %v1381
    %v1383 = vmul.f32 %v1382, 0.044715
    %v1384 = vadd.f32 %v1378, %v1383
    %v1385 = vmul.f32 %v1384, 0.7978846
    %v1386 = vtanh.pop %v1385
    %v1387 = vadd.f32 %v1386, 1.0
    %v1388 = vmul.f32 %v1387, 0.5
    %v1389 = vmul.f32 %v1378, %v1388
    %v1390 = vadd.f32 %v474, %v1296
    %v1391 = vadd.f32 %v1390, %v1389
    %v1392 = vld [vmem:[#allocation2 + $0x410] sm:$0xff]
    %v1393 = vld [vmem:[#allocation2 + $0x418] sm:$0xff]
    %v1394 = vld [vmem:[#allocation2 + $0x420] sm:$0xff]
    %v1395 = vld [vmem:[#allocation2 + $0x428] sm:$0xff]
    %v1396 = vld [vmem:[#allocation2 + $0x593] sm:$0x1]
    %v1397 = vlaneseq
    %v1398 = vshrl.u32 %v1397, 7
    %v1399 = vsub.s32 0, %v1398
    %v1400 = vrot.slane %v1396, %v1399
    %vm1401 = vcmask 261120
    %v1403 = vsel %vm1401, %v1391, 0
    %1405 = vmatprep.subr.mxu0 0.0
    %1406 = vmatpush1.msra.mxu0 0.0
    %1407 = vmatprep.subr.mxu0 0.0
    %1408 = vmatpush1.msra.mxu0 0.0
    %1409 = vmatprep.subr.mxu0 0.0
    %1410 = vmatpush1.msra.mxu0 0.0
    %1411 = vmatprep.subr.mxu0 0.0
    %1412 = vmatpush1.msra.mxu0 0.0
    %1413 = vmatprep.subr.mxu0 0.0
    %1414 = vmatpush1.msra.mxu0 0.0
    %1415 = vmatprep.subr.mxu0 0.0
    %1416 = vmatpush1.msra.mxu0 0.0
    %1417 = vmatprep.subr.mxu0 0.0
    %1418 = vmatpush1.msra.mxu0 0.0
    %1419 = vmatprep.subr.mxu0 0.0
    %1420 = vmatpush1.msra.mxu0 0.0
    %1421 = vmatprep.subr.mxu0 0.0
    %1422 = vmatpush1.msra.mxu0 0.0
    %1423 = vmatprep.subr.mxu0 0.0
    %1424 = vmatpush1.msra.mxu0 0.0
    %1425 = vmatprep.subr.mxu0 0.0
    %1426 = vmatpush1.msra.mxu0 0.0
    %1427 = vmatprep.subr.mxu0 0.0
    %1428 = vmatpush1.msra.mxu0 0.0
    %1429 = vmatprep.subr.mxu0 0.0
    %1430 = vmatpush1.msra.mxu0 %v1395
    %1431 = vmatprep.subr.mxu0 0.0
    %1432 = vmatpush1.msra.mxu0 %v1394
    %1433 = vmatprep.subr.mxu0 0.0
    %1434 = vmatpush1.msra.mxu0 %v1393
    %1435 = vmatprep.subr.mxu0 0.0
    %1436 = vmatpush1.msra.mxu0 %v1392
    %1437 = vmatprep.subr.mxu0 0.0
    %1438 = vmatpush2.msra.mxu0 0.0
    %1439 = vmatprep.subr.mxu0 0.0
    %1440 = vmatpush2.msra.mxu0 0.0
    %1441 = vmatprep.subr.mxu0 0.0
    %1442 = vmatpush2.msra.mxu0 0.0
    %1443 = vmatprep.subr.mxu0 0.0
    %1444 = vmatpush2.msra.mxu0 0.0
    %1445 = vmatprep.subr.mxu0 0.0
    %1446 = vmatpush2.msra.mxu0 0.0
    %1447 = vmatprep.subr.mxu0 0.0
    %1448 = vmatpush2.msra.mxu0 0.0
    %1449 = vmatprep.subr.mxu0 0.0
    %1450 = vmatpush2.msra.mxu0 0.0
    %1451 = vmatprep.subr.mxu0 0.0
    %1452 = vmatpush2.msra.mxu0 0.0
    %1453 = vmatprep.subr.mxu0 0.0
    %1454 = vmatpush2.msra.mxu0 0.0
    %1455 = vmatprep.subr.mxu0 0.0
    %1456 = vmatpush2.msra.mxu0 0.0
    %1457 = vmatprep.subr.mxu0 0.0
    %1458 = vmatpush2.msra.mxu0 0.0
    %1459 = vmatprep.subr.mxu0 0.0
    %1460 = vmatpush2.msra.mxu0 0.0
    %1461 = vmatprep.subr.mxu0 0.0
    %1462 = vmatpush2.msra.mxu0 0.0
    %1463 = vmatprep.subr.mxu0 0.0
    %1464 = vmatpush2.msra.mxu0 0.0
    %1465 = vmatprep.subr.mxu0 0.0
    %1466 = vmatpush2.msra.mxu0 0.0
    %1467 = vmatprep.subr.mxu0 0.0
    %1468 = vmatpush2.msra.mxu0 0.0
    %1469 = vmatprep.mubr.f32.mxu0 0.0
    %1470 = vmatmul.mubr.f32.gmra.mxu0 %v1403
    %v1471 = vpop.f32.mrf.mxu0
    %v1472 = vadd.f32 %v1400, %v1471
    %v1473 = vpop.f32.mrf.mxu0
    %1474 = vdwg.mxu0
    %v1475 = vmul.f32 %v1472, %v1472
    %v1476 = vmul.f32 %v1472, %v1475
    %v1477 = vmul.f32 %v1476, 0.044715
    %v1478 = vadd.f32 %v1472, %v1477
    %v1479 = vmul.f32 %v1478, 0.7978846
    %v1480 = vtanh.pop %v1479
    %v1481 = vadd.f32 %v1480, 1.0
    %v1482 = vmul.f32 %v1481, 0.5
    %v1483 = vmul.f32 %v1472, %v1482
    %vm1484 = vcmask 257024
    %v1485 = vsel %vm1484, %v1483, 0.0
    %1486 = vadd.xlane.f32.xlu0 %v1485
    %v1487 = vpop.xlane.xlu0 %1486
    %v1488 = vrcp.pop 32.0
    %v1489 = vmul.f32 %v1487, %v1488
    %v1490 = vsub.f32 %v1483, %v1489
    %v1491 = vmul.f32 %v1490, %v1490
    %v1492 = vsel %vm1484, %v1491, 0.0
    %1493 = vadd.xlane.f32.xlu0 %v1492
    %v1494 = vpop.xlane.xlu0 %1493
    %v1495 = vmul.f32 %v1494, %v1488
    %v1496 = vadd.f32 %v1495, 1e-05
    %v1497 = vrsqrt.pop %v1496
    %v1498 = vmul.f32 %v1490, %v1497
    %v1499 = vld [vmem:[#allocation2 + $0x594] sm:$0x1]
    %v1500 = vlaneseq
    %v1501 = vshrl.u32 %v1500, 7
    %v1502 = vsub.s32 0, %v1501
    %v1503 = vrot.slane %v1499, %v1502
    %v1504 = vmul.f32 %v1498, %v1503
    %v1505 = vld [vmem:[#allocation2 + $0x595] sm:$0x1]
    %v1506 = vlaneseq
    %v1507 = vshrl.u32 %v1506, 7
    %v1508 = vsub.s32 0, %v1507
    %v1509 = vrot.slane %v1505, %v1508
    %v1510 = vadd.f32 %v1504, %v1509
    %v1511 = vld [vmem:[#allocation2 + $0x430] sm:$0xff]
    %v1512 = vld [vmem:[#allocation2 + $0x438] sm:$0xff]
    %v1513 = vld [vmem:[#allocation2 + $0x440] sm:$0xff]
    %v1514 = vld [vmem:[#allocation2 + $0x448] sm:$0xff]
    %v1515 = vld [vmem:[#allocation2 + $0x596] sm:$0x1]
    %v1516 = vlaneseq
    %v1517 = vshrl.u32 %v1516, 7
    %v1518 = vsub.s32 0, %v1517
    %v1519 = vrot.slane %v1515, %v1518
    %v1521 = vsel %vm1401, %v1510, 0
    %1523 = vmatprep.subr.mxu0 0.0
    %1524 = vmatpush1.msra.mxu0 0.0
    %1525 = vmatprep.subr.mxu0 0.0
    %1526 = vmatpush1.msra.mxu0 0.0
    %1527 = vmatprep.subr.mxu0 0.0
    %1528 = vmatpush1.msra.mxu0 0.0
    %1529 = vmatprep.subr.mxu0 0.0
    %1530 = vmatpush1.msra.mxu0 0.0
    %1531 = vmatprep.subr.mxu0 0.0
    %1532 = vmatpush1.msra.mxu0 0.0
    %1533 = vmatprep.subr.mxu0 0.0
    %1534 = vmatpush1.msra.mxu0 0.0
    %1535 = vmatprep.subr.mxu0 0.0
    %1536 = vmatpush1.msra.mxu0 0.0
    %1537 = vmatprep.subr.mxu0 0.0
    %1538 = vmatpush1.msra.mxu0 0.0
    %1539 = vmatprep.subr.mxu0 0.0
    %1540 = vmatpush1.msra.mxu0 0.0
    %1541 = vmatprep.subr.mxu0 0.0
    %1542 = vmatpush1.msra.mxu0 0.0
    %1543 = vmatprep.subr.mxu0 0.0
    %1544 = vmatpush1.msra.mxu0 0.0
    %1545 = vmatprep.subr.mxu0 0.0
    %1546 = vmatpush1.msra.mxu0 0.0
    %1547 = vmatprep.subr.mxu0 0.0
    %1548 = vmatpush1.msra.mxu0 %v1514
    %1549 = vmatprep.subr.mxu0 0.0
    %1550 = vmatpush1.msra.mxu0 %v1513
    %1551 = vmatprep.subr.mxu0 0.0
    %1552 = vmatpush1.msra.mxu0 %v1512
    %1553 = vmatprep.subr.mxu0 0.0
    %1554 = vmatpush1.msra.mxu0 %v1511
    %1555 = vmatprep.subr.mxu0 0.0
    %1556 = vmatpush2.msra.mxu0 0.0
    %1557 = vmatprep.subr.mxu0 0.0
    %1558 = vmatpush2.msra.mxu0 0.0
    %1559 = vmatprep.subr.mxu0 0.0
    %1560 = vmatpush2.msra.mxu0 0.0
    %1561 = vmatprep.subr.mxu0 0.0
    %1562 = vmatpush2.msra.mxu0 0.0
    %1563 = vmatprep.subr.mxu0 0.0
    %1564 = vmatpush2.msra.mxu0 0.0
    %1565 = vmatprep.subr.mxu0 0.0
    %1566 = vmatpush2.msra.mxu0 0.0
    %1567 = vmatprep.subr.mxu0 0.0
    %1568 = vmatpush2.msra.mxu0 0.0
    %1569 = vmatprep.subr.mxu0 0.0
    %1570 = vmatpush2.msra.mxu0 0.0
    %1571 = vmatprep.subr.mxu0 0.0
    %1572 = vmatpush2.msra.mxu0 0.0
    %1573 = vmatprep.subr.mxu0 0.0
    %1574 = vmatpush2.msra.mxu0 0.0
    %1575 = vmatprep.subr.mxu0 0.0
    %1576 = vmatpush2.msra.mxu0 0.0
    %1577 = vmatprep.subr.mxu0 0.0
    %1578 = vmatpush2.msra.mxu0 0.0
    %1579 = vmatprep.subr.mxu0 0.0
    %1580 = vmatpush2.msra.mxu0 0.0
    %1581 = vmatprep.subr.mxu0 0.0
    %1582 = vmatpush2.msra.mxu0 0.0
    %1583 = vmatprep.subr.mxu0 0.0
    %1584 = vmatpush2.msra.mxu0 0.0
    %1585 = vmatprep.subr.mxu0 0.0
    %1586 = vmatpush2.msra.mxu0 0.0
    %1587 = vmatprep.mubr.f32.mxu0 0.0
    %1588 = vmatmul.mubr.f32.gmra.mxu0 %v1521
    %v1589 = vpop.f32.mrf.mxu0
    %v1590 = vadd.f32 %v1519, %v1589
    %v1591 = vpop.f32.mrf.mxu0
    %1592 = vdwg.mxu0
    %vm1593 = vcmask 44032
    %v1594 = vsel %vm1593, %v1590, -inf
    %1595 = vmax.xlane.f32.xlu0 %v1594
    %v1596 = vpop.xlane.xlu0 %1595
    %v1597 = vsub.f32 %v1590, %v1596
    %v1598 = vmul.f32 %v1597, 1.442695
    %v1599 = vpow.pop %v1598
    %v1600 = vsel %vm1593, %v1599, 0.0
    %1601 = vadd.xlane.f32.xlu0 %v1600
    %v1602 = vpop.xlane.xlu0 %1601
    %v1603 = vrcp.pop %v1602
    %v1604 = vmul.f32 %v1599, %v1603
    %v1605 = vld [vmem:[%s4] sm:$0xff]
    %v1606 = vld [vmem:[%s4 + $0x8] sm:$0xff]
    %v1607 = vld [vmem:[%s4 + $0x10] sm:$0xff]
    %v1608 = vld [vmem:[%s4 + $0x18] sm:$0xff]
    %v1609 = vld [vmem:[%s4 + $0x20] sm:$0xff]
    %v1610 = vld [vmem:[%s4 + $0x28] sm:$0xff]
    %v1611 = vld [vmem:[%s4 + $0x30] sm:$0xff]
    %v1612 = vld [vmem:[%s4 + $0x38] sm:$0xff]
    %s1613 = scalar_lea.vmem %s4, 64
    %v1614 = vld [vmem:[%s1613] ss:$8 sm:$0x3]
    %v1615 = vld [vmem:[%s4 + $0x50] sm:$0x3f]
    %v1616 = vld [vmem:[%s4 + $0x58] sm:$0x3f]
    %v1618 = vlaneseq
    %v1619 = vshrl.u32 %v1618, 7
    %v1620 = vsub.s32 0, %v1619
    %v1621 = vrot.slane %v1614, %v1620
    %v1622 = vlaneseq
    %v1623 = vshrl.u32 %v1622, 7
    %v1624 = vsub.s32 1, %v1623
    %v1625 = vrot.slane %v1614, %v1624
    %1628 = vmatprep.subr.mxu0 0.0
    %1629 = vmatpush1.msra.mxu0 0.0
    %1630 = vmatprep.subr.mxu0 0.0
    %1631 = vmatpush1.msra.mxu0 0.0
    %1632 = vmatprep.subr.mxu0 0.0
    %1633 = vmatpush1.msra.mxu0 0.0
    %1634 = vmatprep.subr.mxu0 0.0
    %1635 = vmatpush1.msra.mxu0 0.0
    %1636 = vmatprep.subr.mxu0 0.0
    %1637 = vmatpush1.msra.mxu0 0.0
    %1638 = vmatprep.subr.mxu0 0.0
    %1639 = vmatpush1.msra.mxu0 0.0
    %1640 = vmatprep.subr.mxu0 0.0
    %1641 = vmatpush1.msra.mxu0 0.0
    %1642 = vmatprep.subr.mxu0 0.0
    %1643 = vmatpush1.msra.mxu0 0.0
    %1644 = vmatprep.subr.mxu0 0.0
    %1645 = vmatpush1.msra.mxu0 0.0
    %1646 = vmatprep.subr.mxu0 0.0
    %1647 = vmatpush1.msra.mxu0 0.0
    %1648 = vmatprep.subr.mxu0 0.0
    %1649 = vmatpush1.msra.mxu0 0.0
    %1650 = vmatprep.subr.mxu0 0.0
    %1651 = vmatpush1.msra.mxu0 0.0
    %1652 = vmatprep.subr.mxu0 %v1612
    %1653 = vmatpush1.msra.mxu0 %v1611
    %1654 = vmatprep.subr.mxu0 %v1610
    %1655 = vmatpush1.msra.mxu0 %v1609
    %1656 = vmatprep.subr.mxu0 %v1608
    %1657 = vmatpush1.msra.mxu0 %v1607
    %1658 = vmatprep.subr.mxu0 %v1606
    %1659 = vmatpush1.msra.mxu0 %v1605
    %1660 = vmatprep.subr.mxu0 0.0
    %1661 = vmatpush2.msra.mxu0 0.0
    %1662 = vmatprep.subr.mxu0 0.0
    %1663 = vmatpush2.msra.mxu0 0.0
    %1664 = vmatprep.subr.mxu0 0.0
    %1665 = vmatpush2.msra.mxu0 0.0
    %1666 = vmatprep.subr.mxu0 0.0
    %1667 = vmatpush2.msra.mxu0 0.0
    %1668 = vmatprep.subr.mxu0 0.0
    %1669 = vmatpush2.msra.mxu0 0.0
    %1670 = vmatprep.subr.mxu0 0.0
    %1671 = vmatpush2.msra.mxu0 0.0
    %1672 = vmatprep.subr.mxu0 0.0
    %1673 = vmatpush2.msra.mxu0 0.0
    %1674 = vmatprep.subr.mxu0 0.0
    %1675 = vmatpush2.msra.mxu0 0.0
    %1676 = vmatprep.subr.mxu0 0.0
    %1677 = vmatpush2.msra.mxu0 0.0
    %1678 = vmatprep.subr.mxu0 0.0
    %1679 = vmatpush2.msra.mxu0 0.0
    %1680 = vmatprep.subr.mxu0 0.0
    %1681 = vmatpush2.msra.mxu0 0.0
    %1682 = vmatprep.subr.mxu0 0.0
    %1683 = vmatpush2.msra.mxu0 0.0
    %1684 = vmatprep.subr.mxu0 0.0
    %1685 = vmatpush2.msra.mxu0 0.0
    %1686 = vmatprep.subr.mxu0 0.0
    %1687 = vmatpush2.msra.mxu0 0.0
    %1688 = vmatprep.subr.mxu0 0.0
    %1689 = vmatpush2.msra.mxu0 0.0
    %1690 = vmatprep.subr.mxu0 0.0
    %1691 = vmatpush2.msra.mxu0 0.0
    %1692 = vmatprep.mubr.f32.mxu0 0.0
    %1693 = vmatmul.mubr.f32.gmra.mxu0 %v1521
    %v1694 = vpop.f32.mrf.mxu0
    %v1695 = vadd.f32 %v1621, %v1694
    %v1696 = vpop.f32.mrf.mxu0
    %v1697 = vadd.f32 %v1625, %v1696
    %1698 = vdwg.mxu0
    %v1699 = vmul.f32 %v1695, %v1695
    %v1700 = vmul.f32 %v1697, %v1697
    %v1701 = vmul.f32 %v1695, %v1699
    %v1702 = vmul.f32 %v1697, %v1700
    %v1703 = vmul.f32 %v1701, 0.044715
    %v1704 = vmul.f32 %v1702, 0.044715
    %v1705 = vadd.f32 %v1695, %v1703
    %v1706 = vadd.f32 %v1697, %v1704
    %v1707 = vmul.f32 %v1705, 0.7978846
    %v1708 = vmul.f32 %v1706, 0.7978846
    %v1709 = vtanh.pop %v1707
    %v1710 = vtanh.pop %v1708
    %v1711 = vadd.f32 %v1709, 1.0
    %v1712 = vadd.f32 %v1710, 1.0
    %v1713 = vmul.f32 %v1711, 0.5
    %v1714 = vmul.f32 %v1712, 0.5
    %v1715 = vmul.f32 %v1695, %v1713
    %v1716 = vmul.f32 %v1697, %v1714
    %vm1717 = vcmask 48128
    %v1719 = vsel %vm1717, %v1604, 0
    %vm1721 = vcmask 1045504
    %v1723 = vsel %vm1721, %v1615, 0
    %v1726 = vsel %vm1721, %v1616, 0
    %1728 = vmatprep.subr.mxu0 0.0
    %1729 = vmatpush1.msra.mxu0 0.0
    %1730 = vmatprep.subr.mxu0 0.0
    %1731 = vmatpush1.msra.mxu0 0.0
    %1732 = vmatprep.subr.mxu0 0.0
    %1733 = vmatpush1.msra.mxu0 0.0
    %1734 = vmatprep.subr.mxu0 0.0
    %1735 = vmatpush1.msra.mxu0 0.0
    %1736 = vmatprep.subr.mxu0 0.0
    %1737 = vmatpush1.msra.mxu0 0.0
    %1738 = vmatprep.subr.mxu0 0.0
    %1739 = vmatpush1.msra.mxu0 0.0
    %1740 = vmatprep.subr.mxu0 0.0
    %1741 = vmatpush1.msra.mxu0 0.0
    %1742 = vmatprep.subr.mxu0 0.0
    %1743 = vmatpush1.msra.mxu0 0.0
    %1744 = vmatprep.subr.mxu0 0.0
    %1745 = vmatpush1.msra.mxu0 0.0
    %1746 = vmatprep.subr.mxu0 0.0
    %1747 = vmatpush1.msra.mxu0 0.0
    %1748 = vmatprep.subr.mxu0 0.0
    %1749 = vmatpush1.msra.mxu0 0.0
    %1750 = vmatprep.subr.mxu0 0.0
    %1751 = vmatpush1.msra.mxu0 0.0
    %1752 = vmatprep.subr.mxu0 0.0
    %1753 = vmatpush1.msra.mxu0 0.0
    %1754 = vmatprep.subr.mxu0 0.0
    %1755 = vmatpush1.msra.mxu0 0.0
    %1756 = vmatprep.subr.mxu0 0.0
    %1757 = vmatpush1.msra.mxu0 0.0
    %1758 = vmatprep.subr.mxu0 %v1726
    %1759 = vmatpush1.msra.mxu0 %v1723
    %1760 = vmatprep.subr.mxu0 0.0
    %1761 = vmatpush2.msra.mxu0 0.0
    %1762 = vmatprep.subr.mxu0 0.0
    %1763 = vmatpush2.msra.mxu0 0.0
    %1764 = vmatprep.subr.mxu0 0.0
    %1765 = vmatpush2.msra.mxu0 0.0
    %1766 = vmatprep.subr.mxu0 0.0
    %1767 = vmatpush2.msra.mxu0 0.0
    %1768 = vmatprep.subr.mxu0 0.0
    %1769 = vmatpush2.msra.mxu0 0.0
    %1770 = vmatprep.subr.mxu0 0.0
    %1771 = vmatpush2.msra.mxu0 0.0
    %1772 = vmatprep.subr.mxu0 0.0
    %1773 = vmatpush2.msra.mxu0 0.0
    %1774 = vmatprep.subr.mxu0 0.0
    %1775 = vmatpush2.msra.mxu0 0.0
    %1776 = vmatprep.subr.mxu0 0.0
    %1777 = vmatpush2.msra.mxu0 0.0
    %1778 = vmatprep.subr.mxu0 0.0
    %1779 = vmatpush2.msra.mxu0 0.0
    %1780 = vmatprep.subr.mxu0 0.0
    %1781 = vmatpush2.msra.mxu0 0.0
    %1782 = vmatprep.subr.mxu0 0.0
    %1783 = vmatpush2.msra.mxu0 0.0
    %1784 = vmatprep.subr.mxu0 0.0
    %1785 = vmatpush2.msra.mxu0 0.0
    %1786 = vmatprep.subr.mxu0 0.0
    %1787 = vmatpush2.msra.mxu0 0.0
    %1788 = vmatprep.subr.mxu0 0.0
    %1789 = vmatpush2.msra.mxu0 0.0
    %1790 = vmatprep.subr.mxu0 0.0
    %1791 = vmatpush2.msra.mxu0 0.0
    %1792 = vmatprep.mubr.f32.mxu0 0.0
    %1793 = vmatmul.mubr.f32.gmra.mxu0 %v1719
    %v1794 = vpop.f32.mrf.mxu0
    %v1795 = vadd.f32 0.0, %v1794
    %v1796 = vpop.f32.mrf.mxu0
    %v1797 = vadd.f32 0.0, %v1796
    %1798 = vdwg.mxu0
    %v1799 = vld [vmem:[#allocation2 + $0x470] sm:$0xff]
    %v1800 = vld [vmem:[#allocation2 + $0x478] sm:$0xff]
    %v1801 = vld [vmem:[#allocation2 + $0x480] sm:$0xff]
    %v1802 = vld [vmem:[#allocation2 + $0x488] sm:$0xff]
    %v1803 = vld [vmem:[#allocation2 + $0x490] sm:$0xff]
    %v1804 = vld [vmem:[#allocation2 + $0x498] sm:$0xff]
    %v1805 = vld [vmem:[#allocation2 + $0x4a0] sm:$0xff]
    %v1806 = vld [vmem:[#allocation2 + $0x4a8] sm:$0xff]
    %v1807 = vld [vmem:[#allocation2 + $0x4b0] sm:$0xff]
    %v1808 = vld [vmem:[#allocation2 + $0x4b8] sm:$0xff]
    %v1809 = vld [vmem:[#allocation2 + $0x4c0] sm:$0xff]
    %v1810 = vld [vmem:[#allocation2 + $0x4c8] sm:$0xff]
    %v1811 = vld [vmem:[#allocation2 + $0x4d0] sm:$0xff]
    %v1812 = vld [vmem:[#allocation2 + $0x4d8] sm:$0xff]
    %v1813 = vld [vmem:[#allocation2 + $0x4e0] sm:$0xff]
    %v1814 = vld [vmem:[#allocation2 + $0x4e8] sm:$0xff]
    %v1815 = vld [vmem:[#allocation2 + $0x4f0] sm:$0xff]
    %v1816 = vld [vmem:[#allocation2 + $0x4f8] sm:$0xff]
    %v1817 = vld [vmem:[#allocation2 + $0x500] sm:$0xff]
    %v1818 = vld [vmem:[#allocation2 + $0x508] sm:$0xff]
    %v1819 = vld [vmem:[#allocation2 + $0x510] sm:$0xff]
    %v1820 = vld [vmem:[#allocation2 + $0x518] sm:$0xff]
    %v1821 = vld [vmem:[#allocation2 + $0x520] sm:$0xff]
    %v1822 = vld [vmem:[#allocation2 + $0x528] sm:$0xff]
    %v1823 = vld [vmem:[#allocation2 + $0x59a] sm:$0x3f]
    %v1824 = vmul.f32 %v1715, %v1795
    %v1825 = vmul.f32 %v1716, %v1797
    %v1827 = vsel %vm1721, %v1823, 0
    %1829 = vmatprep.subr.mxu0 0.0
    %1830 = vmatpush1.msra.mxu0 0.0
    %1831 = vmatprep.subr.mxu0 0.0
    %1832 = vmatpush1.msra.mxu0 0.0
    %1833 = vmatprep.subr.mxu0 0.0
    %1834 = vmatpush1.msra.mxu0 0.0
    %1835 = vmatprep.subr.mxu0 0.0
    %1836 = vmatpush1.msra.mxu0 0.0
    %1837 = vmatprep.subr.mxu0 0.0
    %1838 = vmatpush1.msra.mxu0 0.0
    %1839 = vmatprep.subr.mxu0 0.0
    %1840 = vmatpush1.msra.mxu0 0.0
    %1841 = vmatprep.subr.mxu0 0.0
    %1842 = vmatpush1.msra.mxu0 0.0
    %1843 = vmatprep.subr.mxu0 0.0
    %1844 = vmatpush1.msra.mxu0 0.0
    %1845 = vmatprep.subr.mxu0 0.0
    %1846 = vmatpush1.msra.mxu0 0.0
    %1847 = vmatprep.subr.mxu0 0.0
    %1848 = vmatpush1.msra.mxu0 0.0
    %1849 = vmatprep.subr.mxu0 0.0
    %1850 = vmatpush1.msra.mxu0 0.0
    %1851 = vmatprep.subr.mxu0 0.0
    %1852 = vmatpush1.msra.mxu0 0.0
    %1853 = vmatprep.subr.mxu0 0.0
    %1854 = vmatpush1.msra.mxu0 0.0
    %1855 = vmatprep.subr.mxu0 0.0
    %1856 = vmatpush1.msra.mxu0 0.0
    %1857 = vmatprep.subr.mxu0 0.0
    %1858 = vmatpush1.msra.mxu0 0.0
    %1859 = vmatprep.subr.mxu0 0.0
    %1860 = vmatpush1.msra.mxu0 %v1827
    %1861 = vmatprep.subr.mxu0 0.0
    %1862 = vmatpush2.msra.mxu0 0.0
    %1863 = vmatprep.subr.mxu0 0.0
    %1864 = vmatpush2.msra.mxu0 0.0
    %1865 = vmatprep.subr.mxu0 0.0
    %1866 = vmatpush2.msra.mxu0 0.0
    %1867 = vmatprep.subr.mxu0 0.0
    %1868 = vmatpush2.msra.mxu0 0.0
    %1869 = vmatprep.subr.mxu0 0.0
    %1870 = vmatpush2.msra.mxu0 0.0
    %1871 = vmatprep.subr.mxu0 0.0
    %1872 = vmatpush2.msra.mxu0 0.0
    %1873 = vmatprep.subr.mxu0 0.0
    %1874 = vmatpush2.msra.mxu0 0.0
    %1875 = vmatprep.subr.mxu0 0.0
    %1876 = vmatpush2.msra.mxu0 0.0
    %1877 = vmatprep.subr.mxu0 0.0
    %1878 = vmatpush2.msra.mxu0 0.0
    %1879 = vmatprep.subr.mxu0 0.0
    %1880 = vmatpush2.msra.mxu0 0.0
    %1881 = vmatprep.subr.mxu0 0.0
    %1882 = vmatpush2.msra.mxu0 0.0
    %1883 = vmatprep.subr.mxu0 0.0
    %1884 = vmatpush2.msra.mxu0 0.0
    %1885 = vmatprep.subr.mxu0 0.0
    %1886 = vmatpush2.msra.mxu0 0.0
    %1887 = vmatprep.subr.mxu0 0.0
    %1888 = vmatpush2.msra.mxu0 0.0
    %1889 = vmatprep.subr.mxu0 0.0
    %1890 = vmatpush2.msra.mxu0 0.0
    %1891 = vmatprep.subr.mxu0 0.0
    %1892 = vmatpush2.msra.mxu0 0.0
    %1893 = vmatprep.mubr.f32.mxu0 0.0
    %1894 = vmatmul.mubr.f32.gmra.mxu0 %v1719
    %v1895 = vpop.f32.mrf.mxu0
    %v1896 = vadd.f32 0.0, %v1895
    %v1897 = vpop.f32.mrf.mxu0
    %1898 = vdwg.mxu0
    %vm1899 = vcmask 523264
    %v1901 = vsel %vm1899, %v1825, 0
    %1903 = vmatprep.subr.mxu0 0.0
    %1904 = vmatpush1.msra.mxu0 %v1814
    %1905 = vmatprep.subr.mxu0 0.0
    %1906 = vmatpush1.msra.mxu0 %v1813
    %1907 = vmatprep.subr.mxu0 0.0
    %1908 = vmatpush1.msra.mxu0 %v1812
    %1909 = vmatprep.subr.mxu0 0.0
    %1910 = vmatpush1.msra.mxu0 %v1811
    %1911 = vmatprep.subr.mxu0 0.0
    %1912 = vmatpush1.msra.mxu0 %v1810
    %1913 = vmatprep.subr.mxu0 0.0
    %1914 = vmatpush1.msra.mxu0 %v1809
    %1915 = vmatprep.subr.mxu0 0.0
    %1916 = vmatpush1.msra.mxu0 %v1808
    %1917 = vmatprep.subr.mxu0 0.0
    %1918 = vmatpush1.msra.mxu0 %v1807
    %1919 = vmatprep.subr.mxu0 0.0
    %1920 = vmatpush1.msra.mxu0 %v1806
    %1921 = vmatprep.subr.mxu0 0.0
    %1922 = vmatpush1.msra.mxu0 %v1805
    %1923 = vmatprep.subr.mxu0 0.0
    %1924 = vmatpush1.msra.mxu0 %v1804
    %1925 = vmatprep.subr.mxu0 0.0
    %1926 = vmatpush1.msra.mxu0 %v1803
    %1927 = vmatprep.subr.mxu0 0.0
    %1928 = vmatpush1.msra.mxu0 %v1802
    %1929 = vmatprep.subr.mxu0 0.0
    %1930 = vmatpush1.msra.mxu0 %v1801
    %1931 = vmatprep.subr.mxu0 0.0
    %1932 = vmatpush1.msra.mxu0 %v1800
    %1933 = vmatprep.subr.mxu0 0.0
    %1934 = vmatpush1.msra.mxu0 %v1799
    %1935 = vmatprep.subr.mxu0 0.0
    %1936 = vmatpush2.msra.mxu0 0.0
    %1937 = vmatprep.subr.mxu0 0.0
    %1938 = vmatpush2.msra.mxu0 0.0
    %1939 = vmatprep.subr.mxu0 0.0
    %1940 = vmatpush2.msra.mxu0 0.0
    %1941 = vmatprep.subr.mxu0 0.0
    %1942 = vmatpush2.msra.mxu0 0.0
    %1943 = vmatprep.subr.mxu0 0.0
    %1944 = vmatpush2.msra.mxu0 0.0
    %1945 = vmatprep.subr.mxu0 0.0
    %1946 = vmatpush2.msra.mxu0 0.0
    %1947 = vmatprep.subr.mxu0 0.0
    %1948 = vmatpush2.msra.mxu0 0.0
    %1949 = vmatprep.subr.mxu0 0.0
    %1950 = vmatpush2.msra.mxu0 0.0
    %1951 = vmatprep.subr.mxu0 0.0
    %1952 = vmatpush2.msra.mxu0 %v1822
    %1953 = vmatprep.subr.mxu0 0.0
    %1954 = vmatpush2.msra.mxu0 %v1821
    %1955 = vmatprep.subr.mxu0 0.0
    %1956 = vmatpush2.msra.mxu0 %v1820
    %1957 = vmatprep.subr.mxu0 0.0
    %1958 = vmatpush2.msra.mxu0 %v1819
    %1959 = vmatprep.subr.mxu0 0.0
    %1960 = vmatpush2.msra.mxu0 %v1818
    %1961 = vmatprep.subr.mxu0 0.0
    %1962 = vmatpush2.msra.mxu0 %v1817
    %1963 = vmatprep.subr.mxu0 0.0
    %1964 = vmatpush2.msra.mxu0 %v1816
    %1965 = vmatprep.subr.mxu0 0.0
    %1966 = vmatpush2.msra.mxu0 %v1815
    %1967 = vmatprep.mubr.f32.mxu0 %v1901
    %1968 = vmatmul.mubr.f32.gmra.mxu0 %v1824
    %v1969 = vpop.f32.mrf.mxu0
    %v1970 = vadd.f32 %v1896, %v1969
    %v1971 = vpop.f32.mrf.mxu0
    %1972 = vdwg.mxu0
    %v1973 = vld [vmem:[#allocation2 + $0x450] sm:$0xff]
    %v1974 = vld [vmem:[#allocation2 + $0x458] sm:$0xff]
    %v1975 = vld [vmem:[#allocation2 + $0x460] sm:$0xff]
    %v1976 = vld [vmem:[#allocation2 + $0x468] sm:$0xff]
    %v1977 = vld [vmem:[#allocation2 + $0x598] sm:$0x1]
    %v1978 = vlaneseq
    %v1979 = vshrl.u32 %v1978, 7
    %v1980 = vsub.s32 0, %v1979
    %v1981 = vrot.slane %v1977, %v1980
    %v1983 = vsel %vm1401, %v1970, 0
    %1985 = vmatprep.subr.mxu0 0.0
    %1986 = vmatpush1.msra.mxu0 0.0
    %1987 = vmatprep.subr.mxu0 0.0
    %1988 = vmatpush1.msra.mxu0 0.0
    %1989 = vmatprep.subr.mxu0 0.0
    %1990 = vmatpush1.msra.mxu0 0.0
    %1991 = vmatprep.subr.mxu0 0.0
    %1992 = vmatpush1.msra.mxu0 0.0
    %1993 = vmatprep.subr.mxu0 0.0
    %1994 = vmatpush1.msra.mxu0 0.0
    %1995 = vmatprep.subr.mxu0 0.0
    %1996 = vmatpush1.msra.mxu0 0.0
    %1997 = vmatprep.subr.mxu0 0.0
    %1998 = vmatpush1.msra.mxu0 0.0
    %1999 = vmatprep.subr.mxu0 0.0
    %2000 = vmatpush1.msra.mxu0 0.0
    %2001 = vmatprep.subr.mxu0 0.0
    %2002 = vmatpush1.msra.mxu0 0.0
    %2003 = vmatprep.subr.mxu0 0.0
    %2004 = vmatpush1.msra.mxu0 0.0
    %2005 = vmatprep.subr.mxu0 0.0
    %2006 = vmatpush1.msra.mxu0 0.0
    %2007 = vmatprep.subr.mxu0 0.0
    %2008 = vmatpush1.msra.mxu0 0.0
    %2009 = vmatprep.subr.mxu0 0.0
    %2010 = vmatpush1.msra.mxu0 %v1976
    %2011 = vmatprep.subr.mxu0 0.0
    %2012 = vmatpush1.msra.mxu0 %v1975
    %2013 = vmatprep.subr.mxu0 0.0
    %2014 = vmatpush1.msra.mxu0 %v1974
    %2015 = vmatprep.subr.mxu0 0.0
    %2016 = vmatpush1.msra.mxu0 %v1973
    %2017 = vmatprep.subr.mxu0 0.0
    %2018 = vmatpush2.msra.mxu0 0.0
    %2019 = vmatprep.subr.mxu0 0.0
    %2020 = vmatpush2.msra.mxu0 0.0
    %2021 = vmatprep.subr.mxu0 0.0
    %2022 = vmatpush2.msra.mxu0 0.0
    %2023 = vmatprep.subr.mxu0 0.0
    %2024 = vmatpush2.msra.mxu0 0.0
    %2025 = vmatprep.subr.mxu0 0.0
    %2026 = vmatpush2.msra.mxu0 0.0
    %2027 = vmatprep.subr.mxu0 0.0
    %2028 = vmatpush2.msra.mxu0 0.0
    %2029 = vmatprep.subr.mxu0 0.0
    %2030 = vmatpush2.msra.mxu0 0.0
    %2031 = vmatprep.subr.mxu0 0.0
    %2032 = vmatpush2.msra.mxu0 0.0
    %2033 = vmatprep.subr.mxu0 0.0
    %2034 = vmatpush2.msra.mxu0 0.0
    %2035 = vmatprep.subr.mxu0 0.0
    %2036 = vmatpush2.msra.mxu0 0.0
    %2037 = vmatprep.subr.mxu0 0.0
    %2038 = vmatpush2.msra.mxu0 0.0
    %2039 = vmatprep.subr.mxu0 0.0
    %2040 = vmatpush2.msra.mxu0 0.0
    %2041 = vmatprep.subr.mxu0 0.0
    %2042 = vmatpush2.msra.mxu0 0.0
    %2043 = vmatprep.subr.mxu0 0.0
    %2044 = vmatpush2.msra.mxu0 0.0
    %2045 = vmatprep.subr.mxu0 0.0
    %2046 = vmatpush2.msra.mxu0 0.0
    %2047 = vmatprep.subr.mxu0 0.0
    %2048 = vmatpush2.msra.mxu0 0.0
    %2049 = vmatprep.mubr.f32.mxu0 0.0
    %2050 = vmatmul.mubr.f32.gmra.mxu0 %v1983
    %v2051 = vpop.f32.mrf.mxu0
    %v2052 = vadd.f32 %v1981, %v2051
    %v2053 = vpop.f32.mrf.mxu0
    %2054 = vdwg.mxu0
    %v2055 = vmul.f32 %v2052, %v2052
    %v2056 = vmul.f32 %v2052, %v2055
    %v2057 = vmul.f32 %v2056, 0.044715
    %v2058 = vadd.f32 %v2052, %v2057
    %v2059 = vmul.f32 %v2058, 0.7978846
    %v2060 = vtanh.pop %v2059
    %v2061 = vadd.f32 %v2060, 1.0
    %v2062 = vmul.f32 %v2061, 0.5
    %v2063 = vmul.f32 %v2052, %v2062
    %v2064 = vld [vmem:[#allocation2 + $0x530] sm:$0xff]
    %v2065 = vld [vmem:[#allocation2 + $0x538] sm:$0xff]
    %v2066 = vld [vmem:[#allocation2 + $0x540] sm:$0xff]
    %v2067 = vld [vmem:[#allocation2 + $0x548] sm:$0xff]
    %v2068 = vld [vmem:[#allocation2 + $0x550] sm:$0xff]
    %v2069 = vld [vmem:[#allocation2 + $0x558] sm:$0xff]
    %v2070 = vld [vmem:[#allocation2 + $0x560] sm:$0xff]
    %v2071 = vld [vmem:[#allocation2 + $0x568] sm:$0xff]
    %v2073 = vrot.slane %v2063, 2
    %2074 = vrot.lane.b32.xlu0 %v2073, 96
    %v2075 = vpop.permute.xlu0 %2074
    %v2076 = vsel %vm1401, %v2075, 0
    %2078 = vmatprep.subr.mxu0 0.0
    %2079 = vmatpush1.msra.mxu0 0.0
    %2080 = vmatprep.subr.mxu0 0.0
    %2081 = vmatpush1.msra.mxu0 0.0
    %2082 = vmatprep.subr.mxu0 0.0
    %2083 = vmatpush1.msra.mxu0 0.0
    %2084 = vmatprep.subr.mxu0 0.0
    %2085 = vmatpush1.msra.mxu0 0.0
    %2086 = vmatprep.subr.mxu0 0.0
    %2087 = vmatpush1.msra.mxu0 0.0
    %2088 = vmatprep.subr.mxu0 0.0
    %2089 = vmatpush1.msra.mxu0 0.0
    %2090 = vmatprep.subr.mxu0 0.0
    %2091 = vmatpush1.msra.mxu0 0.0
    %2092 = vmatprep.subr.mxu0 0.0
    %2093 = vmatpush1.msra.mxu0 0.0
    %2094 = vmatprep.subr.mxu0 0.0
    %2095 = vmatpush1.msra.mxu0 0.0
    %2096 = vmatprep.subr.mxu0 0.0
    %2097 = vmatpush1.msra.mxu0 0.0
    %2098 = vmatprep.subr.mxu0 0.0
    %2099 = vmatpush1.msra.mxu0 0.0
    %2100 = vmatprep.subr.mxu0 0.0
    %2101 = vmatpush1.msra.mxu0 0.0
    %2102 = vmatprep.subr.mxu0 0.0
    %2103 = vmatpush1.msra.mxu0 %v2071
    %2104 = vmatprep.subr.mxu0 0.0
    %2105 = vmatpush1.msra.mxu0 %v2070
    %2106 = vmatprep.subr.mxu0 0.0
    %2107 = vmatpush1.msra.mxu0 %v2069
    %2108 = vmatprep.subr.mxu0 0.0
    %2109 = vmatpush1.msra.mxu0 %v2068
    %2110 = vmatprep.subr.mxu0 0.0
    %2111 = vmatpush2.msra.mxu0 0.0
    %2112 = vmatprep.subr.mxu0 0.0
    %2113 = vmatpush2.msra.mxu0 0.0
    %2114 = vmatprep.subr.mxu0 0.0
    %2115 = vmatpush2.msra.mxu0 0.0
    %2116 = vmatprep.subr.mxu0 0.0
    %2117 = vmatpush2.msra.mxu0 0.0
    %2118 = vmatprep.subr.mxu0 0.0
    %2119 = vmatpush2.msra.mxu0 0.0
    %2120 = vmatprep.subr.mxu0 0.0
    %2121 = vmatpush2.msra.mxu0 0.0
    %2122 = vmatprep.subr.mxu0 0.0
    %2123 = vmatpush2.msra.mxu0 0.0
    %2124 = vmatprep.subr.mxu0 0.0
    %2125 = vmatpush2.msra.mxu0 0.0
    %2126 = vmatprep.subr.mxu0 0.0
    %2127 = vmatpush2.msra.mxu0 0.0
    %2128 = vmatprep.subr.mxu0 0.0
    %2129 = vmatpush2.msra.mxu0 0.0
    %2130 = vmatprep.subr.mxu0 0.0
    %2131 = vmatpush2.msra.mxu0 0.0
    %2132 = vmatprep.subr.mxu0 0.0
    %2133 = vmatpush2.msra.mxu0 0.0
    %2134 = vmatprep.subr.mxu0 0.0
    %2135 = vmatpush2.msra.mxu0 0.0
    %2136 = vmatprep.subr.mxu0 0.0
    %2137 = vmatpush2.msra.mxu0 0.0
    %2138 = vmatprep.subr.mxu0 0.0
    %2139 = vmatpush2.msra.mxu0 0.0
    %2140 = vmatprep.subr.mxu0 0.0
    %2141 = vmatpush2.msra.mxu0 0.0
    %2142 = vmatprep.mubr.f32.mxu0 0.0
    %2143 = vmatmul.mubr.f32.gmra.mxu0 %v2076
    %v2144 = vpop.f32.mrf.mxu0
    %v2145 = vadd.f32 0.0, %v2144
    %v2146 = vpop.f32.mrf.mxu0
    %2147 = vdwg.mxu0
    %v2148 = vsel %vm1401, %v2063, 0
    %2150 = vmatprep.subr.mxu0 0.0
    %2151 = vmatpush1.msra.mxu0 0.0
    %2152 = vmatprep.subr.mxu0 0.0
    %2153 = vmatpush1.msra.mxu0 0.0
    %2154 = vmatprep.subr.mxu0 0.0
    %2155 = vmatpush1.msra.mxu0 0.0
    %2156 = vmatprep.subr.mxu0 0.0
    %2157 = vmatpush1.msra.mxu0 0.0
    %2158 = vmatprep.subr.mxu0 0.0
    %2159 = vmatpush1.msra.mxu0 0.0
    %2160 = vmatprep.subr.mxu0 0.0
    %2161 = vmatpush1.msra.mxu0 0.0
    %2162 = vmatprep.subr.mxu0 0.0
    %2163 = vmatpush1.msra.mxu0 0.0
    %2164 = vmatprep.subr.mxu0 0.0
    %2165 = vmatpush1.msra.mxu0 0.0
    %2166 = vmatprep.subr.mxu0 0.0
    %2167 = vmatpush1.msra.mxu0 0.0
    %2168 = vmatprep.subr.mxu0 0.0
    %2169 = vmatpush1.msra.mxu0 0.0
    %2170 = vmatprep.subr.mxu0 0.0
    %2171 = vmatpush1.msra.mxu0 0.0
    %2172 = vmatprep.subr.mxu0 0.0
    %2173 = vmatpush1.msra.mxu0 0.0
    %2174 = vmatprep.subr.mxu0 0.0
    %2175 = vmatpush1.msra.mxu0 %v2067
    %2176 = vmatprep.subr.mxu0 0.0
    %2177 = vmatpush1.msra.mxu0 %v2066
    %2178 = vmatprep.subr.mxu0 0.0
    %2179 = vmatpush1.msra.mxu0 %v2065
    %2180 = vmatprep.subr.mxu0 0.0
    %2181 = vmatpush1.msra.mxu0 %v2064
    %2182 = vmatprep.subr.mxu0 0.0
    %2183 = vmatpush2.msra.mxu0 0.0
    %2184 = vmatprep.subr.mxu0 0.0
    %2185 = vmatpush2.msra.mxu0 0.0
    %2186 = vmatprep.subr.mxu0 0.0
    %2187 = vmatpush2.msra.mxu0 0.0
    %2188 = vmatprep.subr.mxu0 0.0
    %2189 = vmatpush2.msra.mxu0 0.0
    %2190 = vmatprep.subr.mxu0 0.0
    %2191 = vmatpush2.msra.mxu0 0.0
    %2192 = vmatprep.subr.mxu0 0.0
    %2193 = vmatpush2.msra.mxu0 0.0
    %2194 = vmatprep.subr.mxu0 0.0
    %2195 = vmatpush2.msra.mxu0 0.0
    %2196 = vmatprep.subr.mxu0 0.0
    %2197 = vmatpush2.msra.mxu0 0.0
    %2198 = vmatprep.subr.mxu0 0.0
    %2199 = vmatpush2.msra.mxu0 0.0
    %2200 = vmatprep.subr.mxu0 0.0
    %2201 = vmatpush2.msra.mxu0 0.0
    %2202 = vmatprep.subr.mxu0 0.0
    %2203 = vmatpush2.msra.mxu0 0.0
    %2204 = vmatprep.subr.mxu0 0.0
    %2205 = vmatpush2.msra.mxu0 0.0
    %2206 = vmatprep.subr.mxu0 0.0
    %2207 = vmatpush2.msra.mxu0 0.0
    %2208 = vmatprep.subr.mxu0 0.0
    %2209 = vmatpush2.msra.mxu0 0.0
    %2210 = vmatprep.subr.mxu0 0.0
    %2211 = vmatpush2.msra.mxu0 0.0
    %2212 = vmatprep.subr.mxu0 0.0
    %2213 = vmatpush2.msra.mxu0 0.0
    %2214 = vmatprep.mubr.f32.mxu0 0.0
    %2215 = vmatmul.mubr.f32.gmra.mxu0 %v2148
    %v2216 = vpop.f32.mrf.mxu0
    %v2217 = vadd.f32 %v2145, %v2216
    %v2218 = vpop.f32.mrf.mxu0
    %2219 = vdwg.mxu0
    %v2220 = vld [vmem:[#allocation2 + $0x597] sm:$0x1]
    %v2221 = vlaneseq
    %v2222 = vshrl.u32 %v2221, 7
    %v2223 = vsub.s32 0, %v2222
    %v2224 = vrot.slane %v2220, %v2223
    %v2225 = vadd.f32 %v2217, %v2224
    %v2226 = vmul.f32 %v2225, %v2225
    %v2227 = vmul.f32 %v2225, %v2226
    %v2228 = vmul.f32 %v2227, 0.044715
    %v2229 = vadd.f32 %v2225, %v2228
    %v2230 = vmul.f32 %v2229, 0.7978846
    %v2231 = vtanh.pop %v2230
    %v2232 = vadd.f32 %v2231, 1.0
    %v2233 = vmul.f32 %v2232, 0.5
    %v2234 = vmul.f32 %v2225, %v2233
    %v2235 = vld [vmem:[#allocation2 + $0x570] sm:$0xff]
    %v2236 = vld [vmem:[#allocation2 + $0x578] sm:$0xff]
    %v2237 = vld [vmem:[#allocation2 + $0x580] sm:$0xff]
    %v2238 = vld [vmem:[#allocation2 + $0x588] sm:$0xff]
    %v2239 = vld [vmem:[#allocation2 + $0x599] sm:$0x1]
    %v2240 = vlaneseq
    %v2241 = vshrl.u32 %v2240, 7
    %v2242 = vsub.s32 0, %v2241
    %v2243 = vrot.slane %v2239, %v2242
    %v2245 = vsel %vm1401, %v2234, 0
    %2247 = vmatprep.subr.mxu0 0.0
    %2248 = vmatpush1.msra.mxu0 0.0
    %2249 = vmatprep.subr.mxu0 0.0
    %2250 = vmatpush1.msra.mxu0 0.0
    %2251 = vmatprep.subr.mxu0 0.0
    %2252 = vmatpush1.msra.mxu0 0.0
    %2253 = vmatprep.subr.mxu0 0.0
    %2254 = vmatpush1.msra.mxu0 0.0
    %2255 = vmatprep.subr.mxu0 0.0
    %2256 = vmatpush1.msra.mxu0 0.0
    %2257 = vmatprep.subr.mxu0 0.0
    %2258 = vmatpush1.msra.mxu0 0.0
    %2259 = vmatprep.subr.mxu0 0.0
    %2260 = vmatpush1.msra.mxu0 0.0
    %2261 = vmatprep.subr.mxu0 0.0
    %2262 = vmatpush1.msra.mxu0 0.0
    %2263 = vmatprep.subr.mxu0 0.0
    %2264 = vmatpush1.msra.mxu0 0.0
    %2265 = vmatprep.subr.mxu0 0.0
    %2266 = vmatpush1.msra.mxu0 0.0
    %2267 = vmatprep.subr.mxu0 0.0
    %2268 = vmatpush1.msra.mxu0 0.0
    %2269 = vmatprep.subr.mxu0 0.0
    %2270 = vmatpush1.msra.mxu0 0.0
    %2271 = vmatprep.subr.mxu0 0.0
    %2272 = vmatpush1.msra.mxu0 %v2238
    %2273 = vmatprep.subr.mxu0 0.0
    %2274 = vmatpush1.msra.mxu0 %v2237
    %2275 = vmatprep.subr.mxu0 0.0
    %2276 = vmatpush1.msra.mxu0 %v2236
    %2277 = vmatprep.subr.mxu0 0.0
    %2278 = vmatpush1.msra.mxu0 %v2235
    %2279 = vmatprep.subr.mxu0 0.0
    %2280 = vmatpush2.msra.mxu0 0.0
    %2281 = vmatprep.subr.mxu0 0.0
    %2282 = vmatpush2.msra.mxu0 0.0
    %2283 = vmatprep.subr.mxu0 0.0
    %2284 = vmatpush2.msra.mxu0 0.0
    %2285 = vmatprep.subr.mxu0 0.0
    %2286 = vmatpush2.msra.mxu0 0.0
    %2287 = vmatprep.subr.mxu0 0.0
    %2288 = vmatpush2.msra.mxu0 0.0
    %2289 = vmatprep.subr.mxu0 0.0
    %2290 = vmatpush2.msra.mxu0 0.0
    %2291 = vmatprep.subr.mxu0 0.0
    %2292 = vmatpush2.msra.mxu0 0.0
    %2293 = vmatprep.subr.mxu0 0.0
    %2294 = vmatpush2.msra.mxu0 0.0
    %2295 = vmatprep.subr.mxu0 0.0
    %2296 = vmatpush2.msra.mxu0 0.0
    %2297 = vmatprep.subr.mxu0 0.0
    %2298 = vmatpush2.msra.mxu0 0.0
    %2299 = vmatprep.subr.mxu0 0.0
    %2300 = vmatpush2.msra.mxu0 0.0
    %2301 = vmatprep.subr.mxu0 0.0
    %2302 = vmatpush2.msra.mxu0 0.0
    %2303 = vmatprep.subr.mxu0 0.0
    %2304 = vmatpush2.msra.mxu0 0.0
    %2305 = vmatprep.subr.mxu0 0.0
    %2306 = vmatpush2.msra.mxu0 0.0
    %2307 = vmatprep.subr.mxu0 0.0
    %2308 = vmatpush2.msra.mxu0 0.0
    %2309 = vmatprep.subr.mxu0 0.0
    %2310 = vmatpush2.msra.mxu0 0.0
    %2311 = vmatprep.mubr.f32.mxu0 0.0
    %2312 = vmatmul.mubr.f32.gmra.mxu0 %v2245
    %v2313 = vpop.f32.mrf.mxu0
    %v2314 = vadd.f32 %v2243, %v2313
    %v2315 = vpop.f32.mrf.mxu0
    %2316 = vdwg.mxu0
    %2317 = vst [vmem:[#allocation5] sm:$0x3] %v2314
    // Predicated region
    $region26: #{_etri_forward_impl.1} parent=1 // pred_check
      _
    $region27: #{_etri_forward_impl.1} parent=1 // pred_check_branch
      %2319 = sbr.rel (0) target = $region29
    $region28: #{_etri_forward_impl.1} parent=1 // pred_region
      %s2321 = ssub.s32 32, 32
      %2322 = vsyncadd [#allocation4], %s2321
      %s2324 = sshll.u32 [#allocation5], 4
      %s2325 = int_to_ptr.vmem [resolvable:$true] %s2324
      %2327 = dma.vmem_to_hbm [thread:$0]  %s2325, 32, %s5, [#allocation4]
    $region29: #{_etri_forward_impl.1} parent=1 // pred_fallthru
      _
    // Predicated region
    $region30: #{_etri_forward_impl.1} parent=1 // pred_check
      _
    $region31: #{_etri_forward_impl.1} parent=1 // pred_check_branch
      %2329 = sbr.rel (0) target = $region33
    $region32: #{_etri_forward_impl.1} parent=1 // pred_region
      %2330 = dma.done [#allocation4], 32
    $region33: #{_etri_forward_impl.1} parent=1 // pred_fallthru
      _
    %2331 = vsyncpa [#allocation3], 1
    %2332 = vsyncpa [#allocation4], 1

</llo_original>
